<compile_context>
chip_gen: v5e
topology: v5e:2x2
jax: 0.10.0
libtpu: 0.0.40
codegen_flags: <defaults>
</compile_context>

<pallas_src>
import math
from functools import partial

import jax
import jax.numpy as jnp
from jax.experimental import pallas as pl
from jax.experimental.pallas import tpu as pltpu


SHRINK_THRES = 0.0025
SHRINK_EPS = 1e-12
NORM_EPS = 1e-12       # F.normalize clamp min
LANE = 128
SUBLANE = 8
NEG_BIG = -1e30        # finite "-inf" bias for padded softmax columns


def _round_up(n, m):
    return ((n + m - 1) // m) * m


def _cdiv(a, b):
    return -(-a // b)


# --------------------------------------------------------------------------
# Kernel
# --------------------------------------------------------------------------
def _memae_kernel(
    x_ref,
    # encoder params (pre-transposed weights [in, out], biases [1, out])
    ew1_ref, eb1_ref, ew2_ref, eb2_ref, ew3_ref, eb3_ref,
    # fused encoder-4 + memory attention: [10, M_pad] / [1, M_pad]
    # (pad-column NEG_BIG mask folded into the bias row)
    encmem_w_ref, encmem_b_ref,
    # fused memory readout + decoder-1: [M_pad, 10] / [1, 10]
    memdec_w_ref, memdec_b_ref,
    # decoder params 2..4 (last layer zero-padded to [60, F_pad] / [1, F_pad])
    dw2_ref, db2_ref, dw3_ref, db3_ref, dw4_ref, db4_ref,
    # outputs (lane-padded)
    out_ref, att_ref,
    *, bf16_transcendentals,
):
    f32 = jnp.float32

    def tanh(z):
        if bf16_transcendentals:
            return jnp.tanh(z.astype(jnp.bfloat16)).astype(f32)
        return jnp.tanh(z)

    def expf(z):
        if bf16_transcendentals:
            return jnp.exp(z.astype(jnp.bfloat16)).astype(f32)
        return jnp.exp(z)

    def linear(h, w_ref, b_ref):
        # weights already [in, out] -> no in-kernel transpose
        return jnp.dot(h, w_ref[...], preferred_element_type=f32) + b_ref[...]

    x = x_ref[...].astype(f32)

    # ---------------- encoder (layers 1..3; layer 4 fused below) ----------
    h = tanh(linear(x, ew1_ref, eb1_ref))
    h = tanh(linear(h, ew2_ref, eb2_ref))
    h = tanh(linear(h, ew3_ref, eb3_ref))

    # ---------------- fused encoder-4 + memory attention ------------------
    # logits = (h @ ew4ᵀ + eb4) @ mem_wᵀ, pad columns carry a NEG_BIG bias
    # (added before the row max, so padded columns can never win the max).
    logits = linear(h, encmem_w_ref, encmem_b_ref)          # [TB, M_pad]

    # softmax over dim=1 (pad columns: exp(NEG_BIG - max) == 0)
    att_max = jnp.max(logits, axis=1, keepdims=True)
    att_exp = expf(logits - att_max)
    denom = jnp.sum(att_exp, axis=1, keepdims=True)
    att = att_exp * pl.reciprocal(denom, approx=True)

    # hard_shrink_relu: relu(a - lambd) * a / (|a - lambd| + eps)
    shifted = att - SHRINK_THRES
    att = (jnp.maximum(shifted, 0.0) * att
           * pl.reciprocal(jnp.abs(shifted) + SHRINK_EPS, approx=True))

    # F.normalize(p=1, dim=1): divide by clamp(sum(|att|), min=eps)
    l1 = jnp.sum(jnp.abs(att), axis=1, keepdims=True)
    att = att * pl.reciprocal(jnp.maximum(l1, NORM_EPS), approx=True)

    # ---------------- fused memory readout + decoder ----------------------
    h = tanh(linear(att, memdec_w_ref, memdec_b_ref))       # (att@mem_w)@dw1ᵀ+db1
    h = tanh(linear(h, dw2_ref, db2_ref))
    h = tanh(linear(h, dw3_ref, db3_ref))
    decoded = linear(h, dw4_ref, db4_ref)                   # [TB, F_pad]

    out_ref[...] = decoded.astype(out_ref.dtype)             # lane-dense store
    att_ref[...] = att.astype(att_ref.dtype)                 # lane-dense store


# --------------------------------------------------------------------------
# Parameter init (PyTorch-style) and host-side preparation
# --------------------------------------------------------------------------
def init_memae_params(key, num_features, mem_dim):
    """Deterministic PyTorch-style init: uniform(-1/sqrt(fan_in), 1/sqrt(fan_in))."""
    enc_dims = [(num_features, 60), (60, 30), (30, 10), (10, 3)]
    dec_dims = [(3, 10), (10, 30), (30, 60), (60, num_features)]

    params = {}
    keys = jax.random.split(key, 2 * (len(enc_dims) + len(dec_dims)) + 1)
    ki = 0

    def make_linear(fan_in, fan_out, kw, kb):
        stdv = 1.0 / math.sqrt(fan_in)
        w = jax.random.uniform(kw, (fan_out, fan_in), jnp.float32, -stdv, stdv)
        b = jax.random.uniform(kb, (1, fan_out), jnp.float32, -stdv, stdv)
        return w, b

    for i, (fi, fo) in enumerate(enc_dims):
        params[f"ew{i+1}"], params[f"eb{i+1}"] = make_linear(
            fi, fo, keys[ki], keys[ki + 1])
        ki += 2
    for i, (fi, fo) in enumerate(dec_dims):
        params[f"dw{i+1}"], params[f"db{i+1}"] = make_linear(
            fi, fo, keys[ki], keys[ki + 1])
        ki += 2

    latent_dim = 3
    stdv = 1.0 / math.sqrt(latent_dim)
    params["mem_w"] = jax.random.uniform(
        keys[ki], (mem_dim, latent_dim), jnp.float32, -stdv, stdv)
    return params


def prepare_memae_params(params, num_features, mem_dim):
    """One-time host-side prep: transpose weights to [in, out], lane-pad the
    memory / last-decoder matrices, and fold two matmuls into the weights
    (exact up to f32 rounding; `encoded` is never an output)."""
    f_pad = _round_up(num_features, LANE)
    m_pad = _round_up(mem_dim, LANE)

    def t(w):
        return jnp.asarray(w, jnp.float32).T

    kp = {}
    for i in (1, 2, 3):
        kp[f"ew{i}"] = t(params[f"ew{i}"])
        kp[f"eb{i}"] = jnp.asarray(params[f"eb{i}"], jnp.float32)

    mem_w = jnp.asarray(params["mem_w"], jnp.float32)                  # [M, 3]
    mem_att = jnp.pad(mem_w.T, ((0, 0), (0, m_pad - mem_dim)))        # [3, M_pad]
    mem_read = jnp.pad(mem_w, ((0, m_pad - mem_dim), (0, 0)))         # [M_pad, 3]

    # Fused encoder-4 + memory attention; fold the pad-column mask into the
    # bias row (0 for real columns, NEG_BIG for padded ones).
    ew4_t = t(params["ew4"])                                           # [10, 3]
    eb4 = jnp.asarray(params["eb4"], jnp.float32)                      # [1, 3]
    pad_mask = jnp.where(jnp.arange(m_pad)[None, :] < mem_dim,
                         0.0, NEG_BIG).astype(jnp.float32)             # [1, M_pad]
    kp["encmem_w"] = ew4_t @ mem_att                                   # [10, M_pad]
    kp["encmem_b"] = eb4 @ mem_att + pad_mask                          # [1, M_pad]

    # Fused memory readout + decoder layer 1.
    dw1_t = t(params["dw1"])                                           # [3, 10]
    kp["memdec_w"] = mem_read @ dw1_t                                  # [M_pad, 10]
    kp["memdec_b"] = jnp.asarray(params["db1"], jnp.float32)           # [1, 10]

    for i in (2, 3):
        kp[f"dw{i}"] = t(params[f"dw{i}"])
        kp[f"db{i}"] = jnp.asarray(params[f"db{i}"], jnp.float32)

    # Last decoder layer zero-padded to lane width -> lane-dense output store.
    dw4_t = t(params["dw4"])                                           # [60, F]
    kp["dw4"] = jnp.pad(dw4_t, ((0, 0), (0, f_pad - num_features)))
    kp["db4"] = jnp.pad(jnp.asarray(params["db4"], jnp.float32),
                        ((0, 0), (0, f_pad - num_features)))
    return kp


_PARAM_ORDER = ("ew1", "eb1", "ew2", "eb2", "ew3", "eb3",
                "encmem_w", "encmem_b", "memdec_w", "memdec_b",
                "dw2", "db2", "dw3", "db3", "dw4", "db4")


# --------------------------------------------------------------------------
# Tile selection (per generation) and forward wrapper
# --------------------------------------------------------------------------
def _device_defaults():
    kind = ""
    try:
        kind = jax.devices()[0].device_kind.lower()
    except Exception:
        pass
    is_v7 = "v7" in kind
    # v7x: only 64 MiB physical VMEM and 2 TensorCores -> smaller tile cap,
    # even grid. v5e/v6e: 128 MiB VMEM -> go bigger and raise the scoped limit.
    tile_cap = 2048 if is_v7 else 4096
    vmem_limit = (48 << 20) if is_v7 else (64 << 20)
    return tile_cap, vmem_limit, is_v7


def _choose_block_batch(batch, tile_cap, even_grid):
    """Large batch tiles (amortize ~0.35 µs/grid-step overhead), >=2 steps so
    the activation DMA pipelines (and both v7x TCs get work)."""
    steps = max(1, _cdiv(batch, tile_cap))
    if batch >= 2 * SUBLANE:
        steps = max(2, steps)
        if even_grid and steps % 2:
            steps += 1
    return _round_up(_cdiv(batch, steps), SUBLANE)


@partial(jax.jit, static_argnames=("num_features", "mem_dim", "block_batch",
                                   "trim_outputs", "bf16_transcendentals",
                                   "out_dtype"))
def memae_forward(x, kparams, *, num_features, mem_dim, block_batch=None,
                  trim_outputs=True, bf16_transcendentals=False,
                  out_dtype=jnp.float32):
    batch = x.shape[0]
    f_pad = _round_up(num_features, LANE)
    m_pad = _round_up(mem_dim, LANE)

    tile_cap, vmem_limit, is_v7 = _device_defaults()
    tb = (block_batch if block_batch is not None
          else _choose_block_batch(batch, tile_cap, even_grid=is_v7))
    b_pad = _round_up(max(batch, tb), tb)
    if b_pad != batch:
        x = jnp.pad(x, ((0, b_pad - batch), (0, 0)))

    args = [x] + [kparams[k] for k in _PARAM_ORDER]

    def resident(p):
        # Weights/biases: same block every grid step -> stay resident in VMEM.
        return pl.BlockSpec(p.shape, lambda i: (0, 0))

    in_specs = [pl.BlockSpec((tb, num_features), lambda i: (i, 0))]
    in_specs += [resident(kparams[k]) for k in _PARAM_ORDER]

    out, att = pl.pallas_call(
        partial(_memae_kernel, bf16_transcendentals=bf16_transcendentals),
        grid=(b_pad // tb,),
        out_shape=(
            jax.ShapeDtypeStruct((b_pad, f_pad), out_dtype),
            jax.ShapeDtypeStruct((b_pad, m_pad), out_dtype),
        ),
        in_specs=in_specs,
        out_specs=(
            pl.BlockSpec((tb, f_pad), lambda i: (i, 0)),
            pl.BlockSpec((tb, m_pad), lambda i: (i, 0)),
        ),
        compiler_params=pltpu.CompilerParams(
            dimension_semantics=("parallel",),
            vmem_limit_bytes=vmem_limit),
    )(*args)

    if trim_outputs:
        return {"output": out[:batch, :num_features],
                "att": att[:batch, :mem_dim]}
    # Padded outputs (rows >= batch / lanes >= num_features|mem_dim are
    # padding): lets large-batch callers fuse the slice / downstream
    # reduction instead of paying an extra HBM round trip here.
    return {"output": out, "att": att}


# --------------------------------------------------------------------------
# Pure-JAX reference (mirrors the PyTorch module) for sanity checking
# --------------------------------------------------------------------------
def _reference_forward(x, params):
    def lin(h, w, b):
        return h @ w.T + b

    h = jnp.tanh(lin(x, params["ew1"], params["eb1"]))
    h = jnp.tanh(lin(h, params["ew2"], params["eb2"]))
    h = jnp.tanh(lin(h, params["ew3"], params["eb3"]))
    enc = lin(h, params["ew4"], params["eb4"])

    w = params["mem_w"]
    att = jax.nn.softmax(enc @ w.T, axis=1)
    shifted = att - SHRINK_THRES
    att = (jnp.maximum(shifted, 0.0) * att) / (jnp.abs(shifted) + SHRINK_EPS)
    att = att / jnp.maximum(jnp.sum(jnp.abs(att), axis=1, keepdims=True), NORM_EPS)
    mem_out = att @ w

    h = jnp.tanh(lin(mem_out, params["dw1"], params["db1"]))
    h = jnp.tanh(lin(h, params["dw2"], params["db2"]))
    h = jnp.tanh(lin(h, params["dw3"], params["db3"]))
    dec = lin(h, params["dw4"], params["db4"])
    return {"output": dec, "att": att}


if __name__ == "__main__":
    batch = 256
    num_features = 16
    mem_dim = 32

    key = jax.random.PRNGKey(0)
    k_params, k_x = jax.random.split(key)
    params = init_memae_params(k_params, num_features, mem_dim)
    x = jax.random.normal(k_x, (batch, num_features), jnp.float32)

    kparams = prepare_memae_params(params, num_features, mem_dim)
    # Default tile selection gives >=2 grid steps here (exercises the batch
    # pipeline); production callers with large batches get 1024-4096 row tiles.
    result = memae_forward(x, kparams, num_features=num_features, mem_dim=mem_dim)
    jax.block_until_ready(result)

    ref = _reference_forward(x, params)
    assert result["output"].shape == (batch, num_features)
    assert result["att"].shape == (batch, mem_dim)
    # Tolerance relaxed vs. pure-f32 because the three row-wise divides use
    # the EUP approximate reciprocal and two matmuls are host-fused (rounding
    # order changes); observed errors are << 1e-2.
    assert jnp.allclose(result["output"], ref["output"], atol=1e-2, rtol=1e-2)
    assert jnp.allclose(result["att"], ref["att"], atol=1e-2, rtol=1e-2)

    print("KERNEL_OK")
</pallas_src>

<mosaic_0001>
module attributes {stable_mosaic.version = 11 : i64} {
  func.func @_memae_kernel(%arg0: i32, %arg1: memref<128x16xf32, #tpu.memory_space<vmem>>, %arg2: memref<16x60xf32, #tpu.memory_space<vmem>>, %arg3: memref<1x60xf32, #tpu.memory_space<vmem>>, %arg4: memref<60x30xf32, #tpu.memory_space<vmem>>, %arg5: memref<1x30xf32, #tpu.memory_space<vmem>>, %arg6: memref<30x10xf32, #tpu.memory_space<vmem>>, %arg7: memref<1x10xf32, #tpu.memory_space<vmem>>, %arg8: memref<10x128xf32, #tpu.memory_space<vmem>>, %arg9: memref<1x128xf32, #tpu.memory_space<vmem>>, %arg10: memref<128x10xf32, #tpu.memory_space<vmem>>, %arg11: memref<1x10xf32, #tpu.memory_space<vmem>>, %arg12: memref<10x30xf32, #tpu.memory_space<vmem>>, %arg13: memref<1x30xf32, #tpu.memory_space<vmem>>, %arg14: memref<30x60xf32, #tpu.memory_space<vmem>>, %arg15: memref<1x60xf32, #tpu.memory_space<vmem>>, %arg16: memref<60x128xf32, #tpu.memory_space<vmem>>, %arg17: memref<1x128xf32, #tpu.memory_space<vmem>>, %arg18: memref<128x128xf32, #tpu.memory_space<vmem>>, %arg19: memref<128x128xf32, #tpu.memory_space<vmem>>) attributes {dimension_semantics = [#tpu.dimension_semantics<parallel>], iteration_bounds = array<i64: 2>, scalar_prefetch = 0 : i64, scratch_operands = 0 : i64, tpu.core_type = #tpu.core_type<tc>, window_params = [{transform_indices = @transform_0, window_bounds = array<i64: 128, 16>}, {pipeline_mode = #tpu.pipeline_mode<synchronous>, transform_indices = @transform_1, window_bounds = array<i64: 16, 60>}, {pipeline_mode = #tpu.pipeline_mode<synchronous>, transform_indices = @transform_2, window_bounds = array<i64: 1, 60>}, {pipeline_mode = #tpu.pipeline_mode<synchronous>, transform_indices = @transform_3, window_bounds = array<i64: 60, 30>}, {pipeline_mode = #tpu.pipeline_mode<synchronous>, transform_indices = @transform_4, window_bounds = array<i64: 1, 30>}, {pipeline_mode = #tpu.pipeline_mode<synchronous>, transform_indices = @transform_5, window_bounds = array<i64: 30, 10>}, {pipeline_mode = #tpu.pipeline_mode<synchronous>, transform_indices = @transform_6, window_bounds = array<i64: 1, 10>}, {pipeline_mode = #tpu.pipeline_mode<synchronous>, transform_indices = @transform_7, window_bounds = array<i64: 10, 128>}, {pipeline_mode = #tpu.pipeline_mode<synchronous>, transform_indices = @transform_8, window_bounds = array<i64: 1, 128>}, {pipeline_mode = #tpu.pipeline_mode<synchronous>, transform_indices = @transform_9, window_bounds = array<i64: 128, 10>}, {pipeline_mode = #tpu.pipeline_mode<synchronous>, transform_indices = @transform_10, window_bounds = array<i64: 1, 10>}, {pipeline_mode = #tpu.pipeline_mode<synchronous>, transform_indices = @transform_11, window_bounds = array<i64: 10, 30>}, {pipeline_mode = #tpu.pipeline_mode<synchronous>, transform_indices = @transform_12, window_bounds = array<i64: 1, 30>}, {pipeline_mode = #tpu.pipeline_mode<synchronous>, transform_indices = @transform_13, window_bounds = array<i64: 30, 60>}, {pipeline_mode = #tpu.pipeline_mode<synchronous>, transform_indices = @transform_14, window_bounds = array<i64: 1, 60>}, {pipeline_mode = #tpu.pipeline_mode<synchronous>, transform_indices = @transform_15, window_bounds = array<i64: 60, 128>}, {pipeline_mode = #tpu.pipeline_mode<synchronous>, transform_indices = @transform_16, window_bounds = array<i64: 1, 128>}, {transform_indices = @transform_17, window_bounds = array<i64: 128, 128>}, {transform_indices = @transform_18, window_bounds = array<i64: 128, 128>}]} {
    %c0 = arith.constant 0 : index
    %c0_0 = arith.constant 0 : index
    %0 = vector.load %arg1[%c0, %c0_0] : memref<128x16xf32, #tpu.memory_space<vmem>>, vector<128x16xf32>
    %c0_1 = arith.constant 0 : index
    %c0_2 = arith.constant 0 : index
    %1 = vector.load %arg2[%c0_1, %c0_2] : memref<16x60xf32, #tpu.memory_space<vmem>>, vector<16x60xf32>
    %cst = arith.constant dense<0.000000e+00> : vector<128x60xf32>
    %2 = tpu.matmul %0, %1, %cst {dimension_numbers = #tpu.dot_dimension_numbers<[1], [0], [0], [1], [0, 0, 1, 1], [], []>} : vector<128x16xf32>, vector<16x60xf32>, vector<128x60xf32> -> vector<128x60xf32>
    %c0_3 = arith.constant 0 : index
    %c0_4 = arith.constant 0 : index
    %3 = vector.load %arg3[%c0_3, %c0_4] : memref<1x60xf32, #tpu.memory_space<vmem>>, vector<1x60xf32>
    %4 = vector.broadcast %3 : vector<1x60xf32> to vector<128x60xf32>
    %5 = arith.addf %2, %4 : vector<128x60xf32>
    %6 = math.tanh %5 : vector<128x60xf32>
    %c0_5 = arith.constant 0 : index
    %c0_6 = arith.constant 0 : index
    %7 = vector.load %arg4[%c0_5, %c0_6] : memref<60x30xf32, #tpu.memory_space<vmem>>, vector<60x30xf32>
    %cst_7 = arith.constant dense<0.000000e+00> : vector<128x30xf32>
    %8 = tpu.matmul %6, %7, %cst_7 {dimension_numbers = #tpu.dot_dimension_numbers<[1], [0], [0], [1], [0, 0, 1, 1], [], []>} : vector<128x60xf32>, vector<60x30xf32>, vector<128x30xf32> -> vector<128x30xf32>
    %c0_8 = arith.constant 0 : index
    %c0_9 = arith.constant 0 : index
    %9 = vector.load %arg5[%c0_8, %c0_9] : memref<1x30xf32, #tpu.memory_space<vmem>>, vector<1x30xf32>
    %10 = vector.broadcast %9 : vector<1x30xf32> to vector<128x30xf32>
    %11 = arith.addf %8, %10 : vector<128x30xf32>
    %12 = math.tanh %11 : vector<128x30xf32>
    %c0_10 = arith.constant 0 : index
    %c0_11 = arith.constant 0 : index
    %13 = vector.load %arg6[%c0_10, %c0_11] : memref<30x10xf32, #tpu.memory_space<vmem>>, vector<30x10xf32>
    %cst_12 = arith.constant dense<0.000000e+00> : vector<128x10xf32>
    %14 = tpu.matmul %12, %13, %cst_12 {dimension_numbers = #tpu.dot_dimension_numbers<[1], [0], [0], [1], [0, 0, 1, 1], [], []>} : vector<128x30xf32>, vector<30x10xf32>, vector<128x10xf32> -> vector<128x10xf32>
    %c0_13 = arith.constant 0 : index
    %c0_14 = arith.constant 0 : index
    %15 = vector.load %arg7[%c0_13, %c0_14] : memref<1x10xf32, #tpu.memory_space<vmem>>, vector<1x10xf32>
    %16 = vector.broadcast %15 : vector<1x10xf32> to vector<128x10xf32>
    %17 = arith.addf %14, %16 : vector<128x10xf32>
    %18 = math.tanh %17 : vector<128x10xf32>
    %c0_15 = arith.constant 0 : index
    %c0_16 = arith.constant 0 : index
    %19 = vector.load %arg8[%c0_15, %c0_16] : memref<10x128xf32, #tpu.memory_space<vmem>>, vector<10x128xf32>
    %cst_17 = arith.constant dense<0.000000e+00> : vector<128x128xf32>
    %20 = tpu.matmul %18, %19, %cst_17 {dimension_numbers = #tpu.dot_dimension_numbers<[1], [0], [0], [1], [0, 0, 1, 1], [], []>} : vector<128x10xf32>, vector<10x128xf32>, vector<128x128xf32> -> vector<128x128xf32>
    %c0_18 = arith.constant 0 : index
    %c0_19 = arith.constant 0 : index
    %21 = vector.load %arg9[%c0_18, %c0_19] : memref<1x128xf32, #tpu.memory_space<vmem>>, vector<1x128xf32>
    %22 = vector.broadcast %21 : vector<1x128xf32> to vector<128x128xf32>
    %23 = arith.addf %20, %22 : vector<128x128xf32>
    %cst_20 = arith.constant dense<0xFF800000> : vector<128xf32>
    %24 = vector.multi_reduction <maximumf>, %23, %cst_20 [1] : vector<128x128xf32> to vector<128xf32>
    %25 = vector.shape_cast %24 : vector<128xf32> to vector<128x1xf32>
    %26 = vector.broadcast %25 : vector<128x1xf32> to vector<128x128xf32>
    %27 = arith.subf %23, %26 : vector<128x128xf32>
    %28 = math.exp %27 : vector<128x128xf32>
    %cst_21 = arith.constant dense<0.000000e+00> : vector<128xf32>
    %29 = vector.multi_reduction <add>, %28, %cst_21 [1] : vector<128x128xf32> to vector<128xf32>
    %30 = vector.shape_cast %29 : vector<128xf32> to vector<128x1xf32>
    %31 = tpu.reciprocal %30 {approx = true} : vector<128x1xf32> -> vector<128x1xf32>
    %32 = vector.broadcast %31 : vector<128x1xf32> to vector<128x128xf32>
    %33 = arith.mulf %28, %32 : vector<128x128xf32>
    %cst_22 = arith.constant 2.500000e-03 : f32
    %34 = vector.broadcast %cst_22 : f32 to vector<128x128xf32>
    %35 = arith.subf %33, %34 : vector<128x128xf32>
    %cst_23 = arith.constant 0.000000e+00 : f32
    %36 = vector.broadcast %cst_23 : f32 to vector<128x128xf32>
    %37 = arith.maximumf %35, %36 : vector<128x128xf32>
    %38 = arith.mulf %37, %33 : vector<128x128xf32>
    %39 = math.absf %35 : vector<128x128xf32>
    %cst_24 = arith.constant 9.99999996E-13 : f32
    %40 = vector.broadcast %cst_24 : f32 to vector<128x128xf32>
    %41 = arith.addf %39, %40 : vector<128x128xf32>
    %42 = tpu.reciprocal %41 {approx = true} : vector<128x128xf32> -> vector<128x128xf32>
    %43 = arith.mulf %38, %42 : vector<128x128xf32>
    %44 = math.absf %43 : vector<128x128xf32>
    %cst_25 = arith.constant dense<0.000000e+00> : vector<128xf32>
    %45 = vector.multi_reduction <add>, %44, %cst_25 [1] : vector<128x128xf32> to vector<128xf32>
    %46 = vector.shape_cast %45 : vector<128xf32> to vector<128x1xf32>
    %cst_26 = arith.constant 9.99999996E-13 : f32
    %47 = vector.broadcast %cst_26 : f32 to vector<128x1xf32>
    %48 = arith.maximumf %46, %47 : vector<128x1xf32>
    %49 = tpu.reciprocal %48 {approx = true} : vector<128x1xf32> -> vector<128x1xf32>
    %50 = vector.broadcast %49 : vector<128x1xf32> to vector<128x128xf32>
    %51 = arith.mulf %43, %50 : vector<128x128xf32>
    %c0_27 = arith.constant 0 : index
    %c0_28 = arith.constant 0 : index
    %52 = vector.load %arg10[%c0_27, %c0_28] : memref<128x10xf32, #tpu.memory_space<vmem>>, vector<128x10xf32>
    %cst_29 = arith.constant dense<0.000000e+00> : vector<128x10xf32>
    %53 = tpu.matmul %51, %52, %cst_29 {dimension_numbers = #tpu.dot_dimension_numbers<[1], [0], [0], [1], [0, 0, 1, 1], [], []>} : vector<128x128xf32>, vector<128x10xf32>, vector<128x10xf32> -> vector<128x10xf32>
    %c0_30 = arith.constant 0 : index
    %c0_31 = arith.constant 0 : index
    %54 = vector.load %arg11[%c0_30, %c0_31] : memref<1x10xf32, #tpu.memory_space<vmem>>, vector<1x10xf32>
    %55 = vector.broadcast %54 : vector<1x10xf32> to vector<128x10xf32>
    %56 = arith.addf %53, %55 : vector<128x10xf32>
    %57 = math.tanh %56 : vector<128x10xf32>
    %c0_32 = arith.constant 0 : index
    %c0_33 = arith.constant 0 : index
    %58 = vector.load %arg12[%c0_32, %c0_33] : memref<10x30xf32, #tpu.memory_space<vmem>>, vector<10x30xf32>
    %cst_34 = arith.constant dense<0.000000e+00> : vector<128x30xf32>
    %59 = tpu.matmul %57, %58, %cst_34 {dimension_numbers = #tpu.dot_dimension_numbers<[1], [0], [0], [1], [0, 0, 1, 1], [], []>} : vector<128x10xf32>, vector<10x30xf32>, vector<128x30xf32> -> vector<128x30xf32>
    %c0_35 = arith.constant 0 : index
    %c0_36 = arith.constant 0 : index
    %60 = vector.load %arg13[%c0_35, %c0_36] : memref<1x30xf32, #tpu.memory_space<vmem>>, vector<1x30xf32>
    %61 = vector.broadcast %60 : vector<1x30xf32> to vector<128x30xf32>
    %62 = arith.addf %59, %61 : vector<128x30xf32>
    %63 = math.tanh %62 : vector<128x30xf32>
    %c0_37 = arith.constant 0 : index
    %c0_38 = arith.constant 0 : index
    %64 = vector.load %arg14[%c0_37, %c0_38] : memref<30x60xf32, #tpu.memory_space<vmem>>, vector<30x60xf32>
    %cst_39 = arith.constant dense<0.000000e+00> : vector<128x60xf32>
    %65 = tpu.matmul %63, %64, %cst_39 {dimension_numbers = #tpu.dot_dimension_numbers<[1], [0], [0], [1], [0, 0, 1, 1], [], []>} : vector<128x30xf32>, vector<30x60xf32>, vector<128x60xf32> -> vector<128x60xf32>
    %c0_40 = arith.constant 0 : index
    %c0_41 = arith.constant 0 : index
    %66 = vector.load %arg15[%c0_40, %c0_41] : memref<1x60xf32, #tpu.memory_space<vmem>>, vector<1x60xf32>
    %67 = vector.broadcast %66 : vector<1x60xf32> to vector<128x60xf32>
    %68 = arith.addf %65, %67 : vector<128x60xf32>
    %69 = math.tanh %68 : vector<128x60xf32>
    %c0_42 = arith.constant 0 : index
    %c0_43 = arith.constant 0 : index
    %70 = vector.load %arg16[%c0_42, %c0_43] : memref<60x128xf32, #tpu.memory_space<vmem>>, vector<60x128xf32>
    %cst_44 = arith.constant dense<0.000000e+00> : vector<128x128xf32>
    %71 = tpu.matmul %69, %70, %cst_44 {dimension_numbers = #tpu.dot_dimension_numbers<[1], [0], [0], [1], [0, 0, 1, 1], [], []>} : vector<128x60xf32>, vector<60x128xf32>, vector<128x128xf32> -> vector<128x128xf32>
    %c0_45 = arith.constant 0 : index
    %c0_46 = arith.constant 0 : index
    %72 = vector.load %arg17[%c0_45, %c0_46] : memref<1x128xf32, #tpu.memory_space<vmem>>, vector<1x128xf32>
    %73 = vector.broadcast %72 : vector<1x128xf32> to vector<128x128xf32>
    %74 = arith.addf %71, %73 : vector<128x128xf32>
    %c0_47 = arith.constant 0 : index
    %c0_48 = arith.constant 0 : index
    %75 = vector.load %arg18[%c0_47, %c0_48] : memref<128x128xf32, #tpu.memory_space<vmem>>, vector<128x128xf32>
    tpu.vector_store %arg18[%c0_47, %c0_48], %74 {strides = array<i32>} : memref<128x128xf32, #tpu.memory_space<vmem>>, vector<128x128xf32>,
    %c0_49 = arith.constant 0 : index
    %c0_50 = arith.constant 0 : index
    %76 = vector.load %arg19[%c0_49, %c0_50] : memref<128x128xf32, #tpu.memory_space<vmem>>, vector<128x128xf32>
    tpu.vector_store %arg19[%c0_49, %c0_50], %51 {strides = array<i32>} : memref<128x128xf32, #tpu.memory_space<vmem>>, vector<128x128xf32>,
    return
  }
  func.func @transform_0(%arg0: i32) -> (i32, i32) {
    %c0_i32 = arith.constant 0 : i32
    %c0_i32_0 = arith.constant 0 : i32
    return %arg0, %c0_i32 : i32, i32
  }
  func.func @transform_1(%arg0: i32) -> (i32, i32) {
    %c0_i32 = arith.constant 0 : i32
    %c0_i32_0 = arith.constant 0 : i32
    %c0_i32_1 = arith.constant 0 : i32
    return %c0_i32, %c0_i32_0 : i32, i32
  }
  func.func @transform_2(%arg0: i32) -> (i32, i32) {
    %c0_i32 = arith.constant 0 : i32
    %c0_i32_0 = arith.constant 0 : i32
    %c0_i32_1 = arith.constant 0 : i32
    return %c0_i32, %c0_i32_0 : i32, i32
  }
  func.func @transform_3(%arg0: i32) -> (i32, i32) {
    %c0_i32 = arith.constant 0 : i32
    %c0_i32_0 = arith.constant 0 : i32
    %c0_i32_1 = arith.constant 0 : i32
    return %c0_i32, %c0_i32_0 : i32, i32
  }
  func.func @transform_4(%arg0: i32) -> (i32, i32) {
    %c0_i32 = arith.constant 0 : i32
    %c0_i32_0 = arith.constant 0 : i32
    %c0_i32_1 = arith.constant 0 : i32
    return %c0_i32, %c0_i32_0 : i32, i32
  }
  func.func @transform_5(%arg0: i32) -> (i32, i32) {
    %c0_i32 = arith.constant 0 : i32
    %c0_i32_0 = arith.constant 0 : i32
    %c0_i32_1 = arith.constant 0 : i32
    return %c0_i32, %c0_i32_0 : i32, i32
  }
  func.func @transform_6(%arg0: i32) -> (i32, i32) {
    %c0_i32 = arith.constant 0 : i32
    %c0_i32_0 = arith.constant 0 : i32
    %c0_i32_1 = arith.constant 0 : i32
    return %c0_i32, %c0_i32_0 : i32, i32
  }
  func.func @transform_7(%arg0: i32) -> (i32, i32) {
    %c0_i32 = arith.constant 0 : i32
    %c0_i32_0 = arith.constant 0 : i32
    %c0_i32_1 = arith.constant 0 : i32
    return %c0_i32, %c0_i32_0 : i32, i32
  }
  func.func @transform_8(%arg0: i32) -> (i32, i32) {
    %c0_i32 = arith.constant 0 : i32
    %c0_i32_0 = arith.constant 0 : i32
    %c0_i32_1 = arith.constant 0 : i32
    return %c0_i32, %c0_i32_0 : i32, i32
  }
  func.func @transform_9(%arg0: i32) -> (i32, i32) {
    %c0_i32 = arith.constant 0 : i32
    %c0_i32_0 = arith.constant 0 : i32
    %c0_i32_1 = arith.constant 0 : i32
    return %c0_i32, %c0_i32_0 : i32, i32
  }
  func.func @transform_10(%arg0: i32) -> (i32, i32) {
    %c0_i32 = arith.constant 0 : i32
    %c0_i32_0 = arith.constant 0 : i32
    %c0_i32_1 = arith.constant 0 : i32
    return %c0_i32, %c0_i32_0 : i32, i32
  }
  func.func @transform_11(%arg0: i32) -> (i32, i32) {
    %c0_i32 = arith.constant 0 : i32
    %c0_i32_0 = arith.constant 0 : i32
    %c0_i32_1 = arith.constant 0 : i32
    return %c0_i32, %c0_i32_0 : i32, i32
  }
  func.func @transform_12(%arg0: i32) -> (i32, i32) {
    %c0_i32 = arith.constant 0 : i32
    %c0_i32_0 = arith.constant 0 : i32
    %c0_i32_1 = arith.constant 0 : i32
    return %c0_i32, %c0_i32_0 : i32, i32
  }
  func.func @transform_13(%arg0: i32) -> (i32, i32) {
    %c0_i32 = arith.constant 0 : i32
    %c0_i32_0 = arith.constant 0 : i32
    %c0_i32_1 = arith.constant 0 : i32
    return %c0_i32, %c0_i32_0 : i32, i32
  }
  func.func @transform_14(%arg0: i32) -> (i32, i32) {
    %c0_i32 = arith.constant 0 : i32
    %c0_i32_0 = arith.constant 0 : i32
    %c0_i32_1 = arith.constant 0 : i32
    return %c0_i32, %c0_i32_0 : i32, i32
  }
  func.func @transform_15(%arg0: i32) -> (i32, i32) {
    %c0_i32 = arith.constant 0 : i32
    %c0_i32_0 = arith.constant 0 : i32
    %c0_i32_1 = arith.constant 0 : i32
    return %c0_i32, %c0_i32_0 : i32, i32
  }
  func.func @transform_16(%arg0: i32) -> (i32, i32) {
    %c0_i32 = arith.constant 0 : i32
    %c0_i32_0 = arith.constant 0 : i32
    %c0_i32_1 = arith.constant 0 : i32
    return %c0_i32, %c0_i32_0 : i32, i32
  }
  func.func @transform_17(%arg0: i32) -> (i32, i32) {
    %c0_i32 = arith.constant 0 : i32
    %c0_i32_0 = arith.constant 0 : i32
    return %arg0, %c0_i32 : i32, i32
  }
  func.func @transform_18(%arg0: i32) -> (i32, i32) {
    %c0_i32 = arith.constant 0 : i32
    %c0_i32_0 = arith.constant 0 : i32
    return %arg0, %c0_i32 : i32, i32
  }
}

</mosaic_0001>

<llo_original>
// kernel: memae_forward.1
$region0: #{memae_forward.1}
  #allocation0 [shape = 'u32[]', space=smem, size = 0x4, offset = 0x4, fixed_abs, tag = 'smem constant byte address 0x4 - core index']
  #allocation1 [shape = 'u32[72,128]{1,0:T(1,128)}', space=vmem, size = 0x9000, scoped, tag = 'internal scratch']
  %s0 = inlined_call_operand.vmem [shape: f32[256,16], index: 0, kind: input, shape index: {}]
  %s1 = inlined_call_operand.vmem [shape: f32[16,60], index: 1, kind: input, shape index: {}]
  %s2 = inlined_call_operand.vmem [shape: f32[1,60], index: 2, kind: input, shape index: {}]
  %s3 = inlined_call_operand.vmem [shape: f32[60,30], index: 3, kind: input, shape index: {}]
  %s4 = inlined_call_operand.vmem [shape: f32[1,30], index: 4, kind: input, shape index: {}]
  %s5 = inlined_call_operand.vmem [shape: f32[30,10], index: 5, kind: input, shape index: {}]
  %s6 = inlined_call_operand.vmem [shape: f32[1,10], index: 6, kind: input, shape index: {}]
  %s7 = inlined_call_operand.vmem [shape: f32[10,128], index: 7, kind: input, shape index: {}]
  %s8 = inlined_call_operand.vmem [shape: f32[1,128], index: 8, kind: input, shape index: {}]
  %s9 = inlined_call_operand.vmem [shape: f32[128,10], index: 9, kind: input, shape index: {}]
  %s10 = inlined_call_operand.vmem [shape: f32[1,10], index: 10, kind: input, shape index: {}]
  %s11 = inlined_call_operand.vmem [shape: f32[10,30], index: 11, kind: input, shape index: {}]
  %s12 = inlined_call_operand.vmem [shape: f32[1,30], index: 12, kind: input, shape index: {}]
  %s13 = inlined_call_operand.vmem [shape: f32[30,60], index: 13, kind: input, shape index: {}]
  %s14 = inlined_call_operand.vmem [shape: f32[1,60], index: 14, kind: input, shape index: {}]
  %s15 = inlined_call_operand.vmem [shape: f32[60,128], index: 15, kind: input, shape index: {}]
  %s16 = inlined_call_operand.vmem [shape: f32[1,128], index: 16, kind: input, shape index: {}]
  %s17 = inlined_call_operand.vmem [shape: f32[256,128], index: 17, kind: output, shape index: {0}]
  %s18 = inlined_call_operand.vmem [shape: f32[256,128], index: 18, kind: output, shape index: {1}]
  %19 = xla_tuple %s17, %s18
  %s20 = sld [smem:[#allocation0]]
  $region109: #{memae_forward.1} parent=0
    _
  %s22 = ssub.s32 1, %s20
  %s23 = scalar_select 0, %s22, %s20
  loop: start=0, step=1, limit=4
  $region2: #{memae_forward.1} parent=0 // loop_pre_header
    _
  $region3: #{memae_forward.1} parent=0 // loop_header
    %s25 = sphi 0, %s29
    %p26 = scmp.ge.s32.totalorder %s25, 4
    %s35 = sphi 0, %s37
    %s38 = sphi 0, %s35
    %s39 = sphi 0, %s38
    %s55 = sphi 0, %s39
    %s59 = sphi 0, %s59
    %s61 = sphi 0, %s59
    %s62 = sphi 0, %s61
    %s76 = sphi 0, %s62
    %s80 = sphi 0, %s80
    %s82 = sphi 0, %s80
    %s83 = sphi 0, %s82
    %s97 = sphi 0, %s83
    %s101 = sphi 0, %s101
    %s103 = sphi 0, %s101
    %s104 = sphi 0, %s103
    %s118 = sphi 0, %s104
    %s122 = sphi 0, %s122
    %s124 = sphi 0, %s122
    %s125 = sphi 0, %s124
    %s139 = sphi 0, %s125
    %s143 = sphi 0, %s143
    %s145 = sphi 0, %s143
    %s146 = sphi 0, %s145
    %s160 = sphi 0, %s146
    %s164 = sphi 0, %s164
    %s166 = sphi 0, %s164
    %s167 = sphi 0, %s166
    %s181 = sphi 0, %s167
    %s185 = sphi 0, %s185
    %s187 = sphi 0, %s185
    %s188 = sphi 0, %s187
    %s202 = sphi 0, %s188
    %s206 = sphi 0, %s206
    %s208 = sphi 0, %s206
    %s209 = sphi 0, %s208
    %s223 = sphi 0, %s209
    %s227 = sphi 0, %s227
    %s229 = sphi 0, %s227
    %s230 = sphi 0, %s229
    %s244 = sphi 0, %s230
    %s248 = sphi 0, %s248
    %s250 = sphi 0, %s248
    %s251 = sphi 0, %s250
    %s265 = sphi 0, %s251
    %s269 = sphi 0, %s269
    %s271 = sphi 0, %s269
    %s272 = sphi 0, %s271
    %s286 = sphi 0, %s272
    %s290 = sphi 0, %s290
    %s292 = sphi 0, %s290
    %s293 = sphi 0, %s292
    %s307 = sphi 0, %s293
    %s311 = sphi 0, %s311
    %s313 = sphi 0, %s311
    %s314 = sphi 0, %s313
    %s328 = sphi 0, %s314
    %s332 = sphi 0, %s332
    %s334 = sphi 0, %s332
    %s335 = sphi 0, %s334
    %s349 = sphi 0, %s335
    %s353 = sphi 0, %s353
    %s355 = sphi 0, %s353
    %s356 = sphi 0, %s355
    %s370 = sphi 0, %s356
    %s374 = sphi 0, %s374
    %s376 = sphi 0, %s374
    %s377 = sphi 0, %s376
    %s391 = sphi 0, %s377
    %s397 = sphi 0, %s399
    %s400 = sphi 0, %s397
    %s401 = sphi 0, %s400
    %s417 = sphi 0, %s401
    %s423 = sphi 0, %s425
    %s426 = sphi 0, %s423
    %s427 = sphi 0, %s426
    %s443 = sphi 0, %s427
  $region4: #{memae_forward.1} parent=0 // loop_header_branch
    %28 = sbr.rel (%p26) target = $region8
  $region5: #{memae_forward.1} parent=0 // loop_body
    %s30 = ssub.s32 %s25, 1
    %s31 = ssub.s32 %s25, 2
    %s32 = sadd.s32 %s25, 1
    %s33 = ssub.s32 %s25, %s32
    %p34 = scmp.eq.s32.totalorder %s33, 0
    %s36 = sadd.s32 %s35, 1
    %s37 = scalar_select %p34, %s35, %s36
    %p40 = pneg %p34
    %p41 = scmp.eq.s32.totalorder %s25, 1
    %p42 = por %p40, %p41
    %p43 = scmp.ne.s32.totalorder %s35, %s38
    %p44 = scmp.eq.s32.totalorder %s25, 0
    %p45 = por %p43, %p44
    %p46 = scmp.ne.s32.totalorder %s35, %s38
    %p47 = scmp.eq.s32.totalorder %s30, 1
    %p48 = por %p46, %p47
    %p49 = scmp.ne.s32.totalorder %s38, %s39
    %p50 = scmp.eq.s32.totalorder %s30, 0
    %p51 = por %p49, %p50
    %p52 = scmp.ne.s32.totalorder %s38, %s39
    %p53 = scmp.eq.s32.totalorder %s31, 1
    %p54 = por %p52, %p53
    %p56 = scmp.ne.s32.totalorder %s39, %s55
    %p57 = scmp.eq.s32.totalorder %s31, 0
    %p58 = por %p56, %p57
    %s60 = sadd.s32 %s59, 1
    %p63 = scmp.eq.s32.totalorder %s25, 1
    %p64 = scmp.ne.s32.totalorder %s59, %s61
    %p65 = scmp.eq.s32.totalorder %s25, 0
    %p66 = por %p64, %p65
    %p67 = scmp.ne.s32.totalorder %s59, %s61
    %p68 = scmp.eq.s32.totalorder %s30, 1
    %p69 = por %p67, %p68
    %p70 = scmp.ne.s32.totalorder %s61, %s62
    %p71 = scmp.eq.s32.totalorder %s30, 0
    %p72 = por %p70, %p71
    %p73 = scmp.ne.s32.totalorder %s61, %s62
    %p74 = scmp.eq.s32.totalorder %s31, 1
    %p75 = por %p73, %p74
    %p77 = scmp.ne.s32.totalorder %s62, %s76
    %p78 = scmp.eq.s32.totalorder %s31, 0
    %p79 = por %p77, %p78
    %s81 = sadd.s32 %s80, 1
    %p84 = scmp.eq.s32.totalorder %s25, 1
    %p85 = scmp.ne.s32.totalorder %s80, %s82
    %p86 = scmp.eq.s32.totalorder %s25, 0
    %p87 = por %p85, %p86
    %p88 = scmp.ne.s32.totalorder %s80, %s82
    %p89 = scmp.eq.s32.totalorder %s30, 1
    %p90 = por %p88, %p89
    %p91 = scmp.ne.s32.totalorder %s82, %s83
    %p92 = scmp.eq.s32.totalorder %s30, 0
    %p93 = por %p91, %p92
    %p94 = scmp.ne.s32.totalorder %s82, %s83
    %p95 = scmp.eq.s32.totalorder %s31, 1
    %p96 = por %p94, %p95
    %p98 = scmp.ne.s32.totalorder %s83, %s97
    %p99 = scmp.eq.s32.totalorder %s31, 0
    %p100 = por %p98, %p99
    %s102 = sadd.s32 %s101, 1
    %p105 = scmp.eq.s32.totalorder %s25, 1
    %p106 = scmp.ne.s32.totalorder %s101, %s103
    %p107 = scmp.eq.s32.totalorder %s25, 0
    %p108 = por %p106, %p107
    %p109 = scmp.ne.s32.totalorder %s101, %s103
    %p110 = scmp.eq.s32.totalorder %s30, 1
    %p111 = por %p109, %p110
    %p112 = scmp.ne.s32.totalorder %s103, %s104
    %p113 = scmp.eq.s32.totalorder %s30, 0
    %p114 = por %p112, %p113
    %p115 = scmp.ne.s32.totalorder %s103, %s104
    %p116 = scmp.eq.s32.totalorder %s31, 1
    %p117 = por %p115, %p116
    %p119 = scmp.ne.s32.totalorder %s104, %s118
    %p120 = scmp.eq.s32.totalorder %s31, 0
    %p121 = por %p119, %p120
    %s123 = sadd.s32 %s122, 1
    %p126 = scmp.eq.s32.totalorder %s25, 1
    %p127 = scmp.ne.s32.totalorder %s122, %s124
    %p128 = scmp.eq.s32.totalorder %s25, 0
    %p129 = por %p127, %p128
    %p130 = scmp.ne.s32.totalorder %s122, %s124
    %p131 = scmp.eq.s32.totalorder %s30, 1
    %p132 = por %p130, %p131
    %p133 = scmp.ne.s32.totalorder %s124, %s125
    %p134 = scmp.eq.s32.totalorder %s30, 0
    %p135 = por %p133, %p134
    %p136 = scmp.ne.s32.totalorder %s124, %s125
    %p137 = scmp.eq.s32.totalorder %s31, 1
    %p138 = por %p136, %p137
    %p140 = scmp.ne.s32.totalorder %s125, %s139
    %p141 = scmp.eq.s32.totalorder %s31, 0
    %p142 = por %p140, %p141
    %s144 = sadd.s32 %s143, 1
    %p147 = scmp.eq.s32.totalorder %s25, 1
    %p148 = scmp.ne.s32.totalorder %s143, %s145
    %p149 = scmp.eq.s32.totalorder %s25, 0
    %p150 = por %p148, %p149
    %p151 = scmp.ne.s32.totalorder %s143, %s145
    %p152 = scmp.eq.s32.totalorder %s30, 1
    %p153 = por %p151, %p152
    %p154 = scmp.ne.s32.totalorder %s145, %s146
    %p155 = scmp.eq.s32.totalorder %s30, 0
    %p156 = por %p154, %p155
    %p157 = scmp.ne.s32.totalorder %s145, %s146
    %p158 = scmp.eq.s32.totalorder %s31, 1
    %p159 = por %p157, %p158
    %p161 = scmp.ne.s32.totalorder %s146, %s160
    %p162 = scmp.eq.s32.totalorder %s31, 0
    %p163 = por %p161, %p162
    %s165 = sadd.s32 %s164, 1
    %p168 = scmp.eq.s32.totalorder %s25, 1
    %p169 = scmp.ne.s32.totalorder %s164, %s166
    %p170 = scmp.eq.s32.totalorder %s25, 0
    %p171 = por %p169, %p170
    %p172 = scmp.ne.s32.totalorder %s164, %s166
    %p173 = scmp.eq.s32.totalorder %s30, 1
    %p174 = por %p172, %p173
    %p175 = scmp.ne.s32.totalorder %s166, %s167
    %p176 = scmp.eq.s32.totalorder %s30, 0
    %p177 = por %p175, %p176
    %p178 = scmp.ne.s32.totalorder %s166, %s167
    %p179 = scmp.eq.s32.totalorder %s31, 1
    %p180 = por %p178, %p179
    %p182 = scmp.ne.s32.totalorder %s167, %s181
    %p183 = scmp.eq.s32.totalorder %s31, 0
    %p184 = por %p182, %p183
    %s186 = sadd.s32 %s185, 1
    %p189 = scmp.eq.s32.totalorder %s25, 1
    %p190 = scmp.ne.s32.totalorder %s185, %s187
    %p191 = scmp.eq.s32.totalorder %s25, 0
    %p192 = por %p190, %p191
    %p193 = scmp.ne.s32.totalorder %s185, %s187
    %p194 = scmp.eq.s32.totalorder %s30, 1
    %p195 = por %p193, %p194
    %p196 = scmp.ne.s32.totalorder %s187, %s188
    %p197 = scmp.eq.s32.totalorder %s30, 0
    %p198 = por %p196, %p197
    %p199 = scmp.ne.s32.totalorder %s187, %s188
    %p200 = scmp.eq.s32.totalorder %s31, 1
    %p201 = por %p199, %p200
    %p203 = scmp.ne.s32.totalorder %s188, %s202
    %p204 = scmp.eq.s32.totalorder %s31, 0
    %p205 = por %p203, %p204
    %s207 = sadd.s32 %s206, 1
    %p210 = scmp.eq.s32.totalorder %s25, 1
    %p211 = scmp.ne.s32.totalorder %s206, %s208
    %p212 = scmp.eq.s32.totalorder %s25, 0
    %p213 = por %p211, %p212
    %p214 = scmp.ne.s32.totalorder %s206, %s208
    %p215 = scmp.eq.s32.totalorder %s30, 1
    %p216 = por %p214, %p215
    %p217 = scmp.ne.s32.totalorder %s208, %s209
    %p218 = scmp.eq.s32.totalorder %s30, 0
    %p219 = por %p217, %p218
    %p220 = scmp.ne.s32.totalorder %s208, %s209
    %p221 = scmp.eq.s32.totalorder %s31, 1
    %p222 = por %p220, %p221
    %p224 = scmp.ne.s32.totalorder %s209, %s223
    %p225 = scmp.eq.s32.totalorder %s31, 0
    %p226 = por %p224, %p225
    %s228 = sadd.s32 %s227, 1
    %p231 = scmp.eq.s32.totalorder %s25, 1
    %p232 = scmp.ne.s32.totalorder %s227, %s229
    %p233 = scmp.eq.s32.totalorder %s25, 0
    %p234 = por %p232, %p233
    %p235 = scmp.ne.s32.totalorder %s227, %s229
    %p236 = scmp.eq.s32.totalorder %s30, 1
    %p237 = por %p235, %p236
    %p238 = scmp.ne.s32.totalorder %s229, %s230
    %p239 = scmp.eq.s32.totalorder %s30, 0
    %p240 = por %p238, %p239
    %p241 = scmp.ne.s32.totalorder %s229, %s230
    %p242 = scmp.eq.s32.totalorder %s31, 1
    %p243 = por %p241, %p242
    %p245 = scmp.ne.s32.totalorder %s230, %s244
    %p246 = scmp.eq.s32.totalorder %s31, 0
    %p247 = por %p245, %p246
    %s249 = sadd.s32 %s248, 1
    %p252 = scmp.eq.s32.totalorder %s25, 1
    %p253 = scmp.ne.s32.totalorder %s248, %s250
    %p254 = scmp.eq.s32.totalorder %s25, 0
    %p255 = por %p253, %p254
    %p256 = scmp.ne.s32.totalorder %s248, %s250
    %p257 = scmp.eq.s32.totalorder %s30, 1
    %p258 = por %p256, %p257
    %p259 = scmp.ne.s32.totalorder %s250, %s251
    %p260 = scmp.eq.s32.totalorder %s30, 0
    %p261 = por %p259, %p260
    %p262 = scmp.ne.s32.totalorder %s250, %s251
    %p263 = scmp.eq.s32.totalorder %s31, 1
    %p264 = por %p262, %p263
    %p266 = scmp.ne.s32.totalorder %s251, %s265
    %p267 = scmp.eq.s32.totalorder %s31, 0
    %p268 = por %p266, %p267
    %s270 = sadd.s32 %s269, 1
    %p273 = scmp.eq.s32.totalorder %s25, 1
    %p274 = scmp.ne.s32.totalorder %s269, %s271
    %p275 = scmp.eq.s32.totalorder %s25, 0
    %p276 = por %p274, %p275
    %p277 = scmp.ne.s32.totalorder %s269, %s271
    %p278 = scmp.eq.s32.totalorder %s30, 1
    %p279 = por %p277, %p278
    %p280 = scmp.ne.s32.totalorder %s271, %s272
    %p281 = scmp.eq.s32.totalorder %s30, 0
    %p282 = por %p280, %p281
    %p283 = scmp.ne.s32.totalorder %s271, %s272
    %p284 = scmp.eq.s32.totalorder %s31, 1
    %p285 = por %p283, %p284
    %p287 = scmp.ne.s32.totalorder %s272, %s286
    %p288 = scmp.eq.s32.totalorder %s31, 0
    %p289 = por %p287, %p288
    %s291 = sadd.s32 %s290, 1
    %p294 = scmp.eq.s32.totalorder %s25, 1
    %p295 = scmp.ne.s32.totalorder %s290, %s292
    %p296 = scmp.eq.s32.totalorder %s25, 0
    %p297 = por %p295, %p296
    %p298 = scmp.ne.s32.totalorder %s290, %s292
    %p299 = scmp.eq.s32.totalorder %s30, 1
    %p300 = por %p298, %p299
    %p301 = scmp.ne.s32.totalorder %s292, %s293
    %p302 = scmp.eq.s32.totalorder %s30, 0
    %p303 = por %p301, %p302
    %p304 = scmp.ne.s32.totalorder %s292, %s293
    %p305 = scmp.eq.s32.totalorder %s31, 1
    %p306 = por %p304, %p305
    %p308 = scmp.ne.s32.totalorder %s293, %s307
    %p309 = scmp.eq.s32.totalorder %s31, 0
    %p310 = por %p308, %p309
    %s312 = sadd.s32 %s311, 1
    %p315 = scmp.eq.s32.totalorder %s25, 1
    %p316 = scmp.ne.s32.totalorder %s311, %s313
    %p317 = scmp.eq.s32.totalorder %s25, 0
    %p318 = por %p316, %p317
    %p319 = scmp.ne.s32.totalorder %s311, %s313
    %p320 = scmp.eq.s32.totalorder %s30, 1
    %p321 = por %p319, %p320
    %p322 = scmp.ne.s32.totalorder %s313, %s314
    %p323 = scmp.eq.s32.totalorder %s30, 0
    %p324 = por %p322, %p323
    %p325 = scmp.ne.s32.totalorder %s313, %s314
    %p326 = scmp.eq.s32.totalorder %s31, 1
    %p327 = por %p325, %p326
    %p329 = scmp.ne.s32.totalorder %s314, %s328
    %p330 = scmp.eq.s32.totalorder %s31, 0
    %p331 = por %p329, %p330
    %s333 = sadd.s32 %s332, 1
    %p336 = scmp.eq.s32.totalorder %s25, 1
    %p337 = scmp.ne.s32.totalorder %s332, %s334
    %p338 = scmp.eq.s32.totalorder %s25, 0
    %p339 = por %p337, %p338
    %p340 = scmp.ne.s32.totalorder %s332, %s334
    %p341 = scmp.eq.s32.totalorder %s30, 1
    %p342 = por %p340, %p341
    %p343 = scmp.ne.s32.totalorder %s334, %s335
    %p344 = scmp.eq.s32.totalorder %s30, 0
    %p345 = por %p343, %p344
    %p346 = scmp.ne.s32.totalorder %s334, %s335
    %p347 = scmp.eq.s32.totalorder %s31, 1
    %p348 = por %p346, %p347
    %p350 = scmp.ne.s32.totalorder %s335, %s349
    %p351 = scmp.eq.s32.totalorder %s31, 0
    %p352 = por %p350, %p351
    %s354 = sadd.s32 %s353, 1
    %p357 = scmp.eq.s32.totalorder %s25, 1
    %p358 = scmp.ne.s32.totalorder %s353, %s355
    %p359 = scmp.eq.s32.totalorder %s25, 0
    %p360 = por %p358, %p359
    %p361 = scmp.ne.s32.totalorder %s353, %s355
    %p362 = scmp.eq.s32.totalorder %s30, 1
    %p363 = por %p361, %p362
    %p364 = scmp.ne.s32.totalorder %s355, %s356
    %p365 = scmp.eq.s32.totalorder %s30, 0
    %p366 = por %p364, %p365
    %p367 = scmp.ne.s32.totalorder %s355, %s356
    %p368 = scmp.eq.s32.totalorder %s31, 1
    %p369 = por %p367, %p368
    %p371 = scmp.ne.s32.totalorder %s356, %s370
    %p372 = scmp.eq.s32.totalorder %s31, 0
    %p373 = por %p371, %p372
    %s375 = sadd.s32 %s374, 1
    %p378 = scmp.eq.s32.totalorder %s25, 1
    %p379 = scmp.ne.s32.totalorder %s374, %s376
    %p380 = scmp.eq.s32.totalorder %s25, 0
    %p381 = por %p379, %p380
    %p382 = scmp.ne.s32.totalorder %s374, %s376
    %p383 = scmp.eq.s32.totalorder %s30, 1
    %p384 = por %p382, %p383
    %p385 = scmp.ne.s32.totalorder %s376, %s377
    %p386 = scmp.eq.s32.totalorder %s30, 0
    %p387 = por %p385, %p386
    %p388 = scmp.ne.s32.totalorder %s376, %s377
    %p389 = scmp.eq.s32.totalorder %s31, 1
    %p390 = por %p388, %p389
    %p392 = scmp.ne.s32.totalorder %s377, %s391
    %p393 = scmp.eq.s32.totalorder %s31, 0
    %p394 = por %p392, %p393
    %s395 = ssub.s32 %s25, %s32
    %p396 = scmp.eq.s32.totalorder %s395, 0
    %s398 = sadd.s32 %s397, 1
    %s399 = scalar_select %p396, %s397, %s398
    %p402 = pneg %p396
    %p403 = scmp.eq.s32.totalorder %s25, 1
    %p404 = por %p402, %p403
    %p405 = scmp.ne.s32.totalorder %s397, %s400
    %p406 = scmp.eq.s32.totalorder %s25, 0
    %p407 = por %p405, %p406
    %p408 = scmp.ne.s32.totalorder %s397, %s400
    %p409 = scmp.eq.s32.totalorder %s30, 1
    %p410 = por %p408, %p409
    %p411 = scmp.ne.s32.totalorder %s400, %s401
    %p412 = scmp.eq.s32.totalorder %s30, 0
    %p413 = por %p411, %p412
    %p414 = scmp.ne.s32.totalorder %s400, %s401
    %p415 = scmp.eq.s32.totalorder %s31, 1
    %p416 = por %p414, %p415
    %p418 = scmp.ne.s32.totalorder %s401, %s417
    %p419 = scmp.eq.s32.totalorder %s31, 0
    %p420 = por %p418, %p419
    %s421 = ssub.s32 %s25, %s32
    %p422 = scmp.eq.s32.totalorder %s421, 0
    %s424 = sadd.s32 %s423, 1
    %s425 = scalar_select %p422, %s423, %s424
    %p428 = pneg %p422
    %p429 = scmp.eq.s32.totalorder %s25, 1
    %p430 = por %p428, %p429
    %p431 = scmp.ne.s32.totalorder %s423, %s426
    %p432 = scmp.eq.s32.totalorder %s25, 0
    %p433 = por %p431, %p432
    %p434 = scmp.ne.s32.totalorder %s423, %s426
    %p435 = scmp.eq.s32.totalorder %s30, 1
    %p436 = por %p434, %p435
    %p437 = scmp.ne.s32.totalorder %s426, %s427
    %p438 = scmp.eq.s32.totalorder %s30, 0
    %p439 = por %p437, %p438
    %p440 = scmp.ne.s32.totalorder %s426, %s427
    %p441 = scmp.eq.s32.totalorder %s31, 1
    %p442 = por %p440, %p441
    %p444 = scmp.ne.s32.totalorder %s427, %s443
    %p445 = scmp.eq.s32.totalorder %s31, 0
    %p446 = por %p444, %p445
    %p447 = scmp.le.s32.totalorder 1, %s25
    %p448 = scmp.lt.s32.totalorder %s25, 3
    %p449 = pnand %p447, %p448
    %p450 = pneg %p449
    // Predicated region
    $region9: #{memae_forward.1} parent=5 // pred_check
      _
    $region10: #{memae_forward.1} parent=5 // pred_check_branch
      %452 = sbr.rel (%p449) target = $region12
    $region11: #{memae_forward.1} parent=5 // pred_region
      %s453 = ssub.s32 %s25, 1
      // Predicated region
      $region13: #{memae_forward.1} parent=11 // pred_check
        %p454 = pneg %p72
      $region14: #{memae_forward.1} parent=11 // pred_check_branch
        %456 = sbr.rel (%p454) target = $region16
      $region15: #{memae_forward.1} parent=11 // pred_region
        _
      $region16: #{memae_forward.1} parent=11 // pred_fallthru
        _
      // Predicated region
      $region17: #{memae_forward.1} parent=11 // pred_check
        %p457 = pneg %p93
      $region18: #{memae_forward.1} parent=11 // pred_check_branch
        %459 = sbr.rel (%p457) target = $region20
      $region19: #{memae_forward.1} parent=11 // pred_region
        _
      $region20: #{memae_forward.1} parent=11 // pred_fallthru
        _
      // Predicated region
      $region21: #{memae_forward.1} parent=11 // pred_check
        %p460 = pneg %p114
      $region22: #{memae_forward.1} parent=11 // pred_check_branch
        %462 = sbr.rel (%p460) target = $region24
      $region23: #{memae_forward.1} parent=11 // pred_region
        _
      $region24: #{memae_forward.1} parent=11 // pred_fallthru
        _
      // Predicated region
      $region25: #{memae_forward.1} parent=11 // pred_check
        %p463 = pneg %p135
      $region26: #{memae_forward.1} parent=11 // pred_check_branch
        %465 = sbr.rel (%p463) target = $region28
      $region27: #{memae_forward.1} parent=11 // pred_region
        _
      $region28: #{memae_forward.1} parent=11 // pred_fallthru
        _
      // Predicated region
      $region29: #{memae_forward.1} parent=11 // pred_check
        %p466 = pneg %p156
      $region30: #{memae_forward.1} parent=11 // pred_check_branch
        %468 = sbr.rel (%p466) target = $region32
      $region31: #{memae_forward.1} parent=11 // pred_region
        _
      $region32: #{memae_forward.1} parent=11 // pred_fallthru
        _
      // Predicated region
      $region33: #{memae_forward.1} parent=11 // pred_check
        %p469 = pneg %p177
      $region34: #{memae_forward.1} parent=11 // pred_check_branch
        %471 = sbr.rel (%p469) target = $region36
      $region35: #{memae_forward.1} parent=11 // pred_region
        _
      $region36: #{memae_forward.1} parent=11 // pred_fallthru
        _
      // Predicated region
      $region37: #{memae_forward.1} parent=11 // pred_check
        %p472 = pneg %p198
      $region38: #{memae_forward.1} parent=11 // pred_check_branch
        %474 = sbr.rel (%p472) target = $region40
      $region39: #{memae_forward.1} parent=11 // pred_region
        _
      $region40: #{memae_forward.1} parent=11 // pred_fallthru
        _
      // Predicated region
      $region41: #{memae_forward.1} parent=11 // pred_check
        %p475 = pneg %p219
      $region42: #{memae_forward.1} parent=11 // pred_check_branch
        %477 = sbr.rel (%p475) target = $region44
      $region43: #{memae_forward.1} parent=11 // pred_region
        _
      $region44: #{memae_forward.1} parent=11 // pred_fallthru
        _
      // Predicated region
      $region45: #{memae_forward.1} parent=11 // pred_check
        %p478 = pneg %p240
      $region46: #{memae_forward.1} parent=11 // pred_check_branch
        %480 = sbr.rel (%p478) target = $region48
      $region47: #{memae_forward.1} parent=11 // pred_region
        _
      $region48: #{memae_forward.1} parent=11 // pred_fallthru
        _
      // Predicated region
      $region49: #{memae_forward.1} parent=11 // pred_check
        %p481 = pneg %p261
      $region50: #{memae_forward.1} parent=11 // pred_check_branch
        %483 = sbr.rel (%p481) target = $region52
      $region51: #{memae_forward.1} parent=11 // pred_region
        _
      $region52: #{memae_forward.1} parent=11 // pred_fallthru
        _
      // Predicated region
      $region53: #{memae_forward.1} parent=11 // pred_check
        %p484 = pneg %p282
      $region54: #{memae_forward.1} parent=11 // pred_check_branch
        %486 = sbr.rel (%p484) target = $region56
      $region55: #{memae_forward.1} parent=11 // pred_region
        _
      $region56: #{memae_forward.1} parent=11 // pred_fallthru
        _
      // Predicated region
      $region57: #{memae_forward.1} parent=11 // pred_check
        %p487 = pneg %p303
      $region58: #{memae_forward.1} parent=11 // pred_check_branch
        %489 = sbr.rel (%p487) target = $region60
      $region59: #{memae_forward.1} parent=11 // pred_region
        _
      $region60: #{memae_forward.1} parent=11 // pred_fallthru
        _
      // Predicated region
      $region61: #{memae_forward.1} parent=11 // pred_check
        %p490 = pneg %p324
      $region62: #{memae_forward.1} parent=11 // pred_check_branch
        %492 = sbr.rel (%p490) target = $region64
      $region63: #{memae_forward.1} parent=11 // pred_region
        _
      $region64: #{memae_forward.1} parent=11 // pred_fallthru
        _
      // Predicated region
      $region65: #{memae_forward.1} parent=11 // pred_check
        %p493 = pneg %p345
      $region66: #{memae_forward.1} parent=11 // pred_check_branch
        %495 = sbr.rel (%p493) target = $region68
      $region67: #{memae_forward.1} parent=11 // pred_region
        _
      $region68: #{memae_forward.1} parent=11 // pred_fallthru
        _
      // Predicated region
      $region69: #{memae_forward.1} parent=11 // pred_check
        %p496 = pneg %p366
      $region70: #{memae_forward.1} parent=11 // pred_check_branch
        %498 = sbr.rel (%p496) target = $region72
      $region71: #{memae_forward.1} parent=11 // pred_region
        _
      $region72: #{memae_forward.1} parent=11 // pred_fallthru
        _
      // Predicated region
      $region73: #{memae_forward.1} parent=11 // pred_check
        %p499 = pneg %p387
      $region74: #{memae_forward.1} parent=11 // pred_check_branch
        %501 = sbr.rel (%p499) target = $region76
      $region75: #{memae_forward.1} parent=11 // pred_region
        _
      $region76: #{memae_forward.1} parent=11 // pred_fallthru
        _
    $region12: #{memae_forward.1} parent=5 // pred_fallthru
      _
    %p502 = scmp.lt.s32.totalorder %s25, 2
    // Predicated region
    $region77: #{memae_forward.1} parent=5 // pred_check
      %p503 = pneg %p502
    $region78: #{memae_forward.1} parent=5 // pred_check_branch
      %505 = sbr.rel (%p503) target = $region80
    $region79: #{memae_forward.1} parent=5 // pred_region
      // Predicated region
      $region81: #{memae_forward.1} parent=79 // pred_check
        %p506 = pneg %p45
      $region82: #{memae_forward.1} parent=79 // pred_check_branch
        %508 = sbr.rel (%p506) target = $region84
      $region83: #{memae_forward.1} parent=79 // pred_region
        %s509 = smul.u32 16, %s25
        %p510 = scmp.lt.s32.totalorder %s509, 31
        %s511 = scalar_select %p510, %s509, 31
        %s512 = smul.addr %s511, 8
        %s513 = scalar_lea.vmem %s0, %s512
        %s514 = smul.u32 16, %s25
      $region84: #{memae_forward.1} parent=79 // pred_fallthru
        _
    $region80: #{memae_forward.1} parent=5 // pred_fallthru
      _
    %p515 = scmp.le.s32.totalorder 1, %s25
    %p516 = scmp.lt.s32.totalorder %s25, 3
    %p517 = pnand %p515, %p516
    %p518 = pneg %p517
    // Predicated region
    $region85: #{memae_forward.1} parent=5 // pred_check
      _
    $region86: #{memae_forward.1} parent=5 // pred_check_branch
      %520 = sbr.rel (%p517) target = $region88
    $region87: #{memae_forward.1} parent=5 // pred_region
      %s521 = ssub.s32 %s25, 1
      %s522 = smul.u32 16, %s30
      %p523 = scmp.lt.s32.totalorder %s522, 31
      %s524 = scalar_select %p523, %s522, 31
      %s525 = smul.addr %s524, 8
      %s526 = scalar_lea.vmem %s0, %s525
      %p527 = pneg %p51
      %p528 = pneg %p48
      %p529 = pneg %p72
      %p530 = pneg %p69
      %p531 = pneg %p93
      %p532 = pneg %p90
      %p533 = pneg %p114
      %p534 = pneg %p111
      %p535 = pneg %p135
      %p536 = pneg %p132
      %p537 = pneg %p156
      %p538 = pneg %p153
      %p539 = pneg %p177
      %p540 = pneg %p174
      %p541 = pneg %p198
      %p542 = pneg %p195
      %p543 = pneg %p219
      %p544 = pneg %p216
      %p545 = pneg %p240
      %p546 = pneg %p237
      %p547 = pneg %p261
      %p548 = pneg %p258
      %p549 = pneg %p282
      %p550 = pneg %p279
      %p551 = pneg %p303
      %p552 = pneg %p300
      %p553 = pneg %p324
      %p554 = pneg %p321
      %p555 = pneg %p345
      %p556 = pneg %p342
      %p557 = pneg %p366
      %p558 = pneg %p363
      %p559 = pneg %p387
      %p560 = pneg %p384
      %p561 = pneg %p413
      %p562 = pneg %p410
      %s563 = smul.u32 16, %s30
      %p564 = scmp.lt.s32.totalorder %s563, 31
      %s565 = scalar_select %p564, %s563, 31
      %s566 = smul.addr %s565, 8
      %s567 = scalar_lea.vmem %s17, %s566
      %p568 = pneg %p439
      %p569 = pneg %p436
      %s570 = smul.u32 16, %s30
      %p571 = scmp.lt.s32.totalorder %s570, 31
      %s572 = scalar_select %p571, %s570, 31
      %s573 = smul.addr %s572, 8
      %s574 = scalar_lea.vmem %s18, %s573
      %s575 = smul.u32 16, %s30
      %p576 = scmp.lt.s32.totalorder %s575, 31
      %s577 = scalar_select %p576, %s575, 31
      %s578 = smul.addr %s577, 8
      %s579 = scalar_lea.vmem %s0, %s578
      %s580 = smul.u32 16, %s30
      %s581 = smul.u32 16, %s30
      %p582 = scmp.lt.s32.totalorder %s581, 31
      %s583 = scalar_select %p582, %s581, 31
      %s584 = smul.addr %s583, 8
      %s585 = scalar_lea.vmem %s17, %s584
      %s586 = smul.u32 16, %s30
      %s587 = smul.u32 16, %s30
      %p588 = scmp.lt.s32.totalorder %s587, 31
      %s589 = scalar_select %p588, %s587, 31
      %s590 = smul.addr %s589, 8
      %s591 = scalar_lea.vmem %s18, %s590
      %s592 = smul.u32 16, %s30
      %v593 = vld [vmem:[%s579] sm:$0xff]
      %v594 = vld [vmem:[%s579 + $0x8] sm:$0xff]
      %v595 = vld [vmem:[%s579 + $0x10] sm:$0xff]
      %v596 = vld [vmem:[%s579 + $0x18] sm:$0xff]
      %v597 = vld [vmem:[%s579 + $0x20] sm:$0xff]
      %v598 = vld [vmem:[%s579 + $0x28] sm:$0xff]
      %v599 = vld [vmem:[%s579 + $0x30] sm:$0xff]
      %v600 = vld [vmem:[%s579 + $0x38] sm:$0xff]
      %v601 = vld [vmem:[%s579 + $0x40] sm:$0xff]
      %v602 = vld [vmem:[%s579 + $0x48] sm:$0xff]
      %v603 = vld [vmem:[%s579 + $0x50] sm:$0xff]
      %v604 = vld [vmem:[%s579 + $0x58] sm:$0xff]
      %v605 = vld [vmem:[%s579 + $0x60] sm:$0xff]
      %v606 = vld [vmem:[%s579 + $0x68] sm:$0xff]
      %v607 = vld [vmem:[%s579 + $0x70] sm:$0xff]
      %v608 = vld [vmem:[%s579 + $0x78] sm:$0xff]
      %v609 = vld [vmem:[%s1] sm:$0xff]
      %v610 = vld [vmem:[%s1 + $0x8] sm:$0xff]
      %v611 = vld [vmem:[%s2] sm:$0x1]
      %v613 = vperm.slane %v611, 0
      %vm615 = vcmask 130048
      %v617 = vsel %vm615, %v593, 0
      %v620 = vsel %vm615, %v594, 0
      %v623 = vsel %vm615, %v595, 0
      %v626 = vsel %vm615, %v596, 0
      %v629 = vsel %vm615, %v597, 0
      %v632 = vsel %vm615, %v598, 0
      %v635 = vsel %vm615, %v599, 0
      %v638 = vsel %vm615, %v600, 0
      %v641 = vsel %vm615, %v601, 0
      %v644 = vsel %vm615, %v602, 0
      %v647 = vsel %vm615, %v603, 0
      %v650 = vsel %vm615, %v604, 0
      %v653 = vsel %vm615, %v605, 0
      %v656 = vsel %vm615, %v606, 0
      %v659 = vsel %vm615, %v607, 0
      %v662 = vsel %vm615, %v608, 0
      %664 = vmatpush.msra.mxu0 0.0
      %665 = vmatpush.msra.mxu0 0.0
      %666 = vmatpush.msra.mxu0 0.0
      %667 = vmatpush.msra.mxu0 0.0
      %668 = vmatpush.msra.mxu0 0.0
      %669 = vmatpush.msra.mxu0 0.0
      %670 = vmatpush.msra.mxu0 0.0
      %671 = vmatpush.msra.mxu0 0.0
      %672 = vmatpush.msra.mxu0 0.0
      %673 = vmatpush.msra.mxu0 0.0
      %674 = vmatpush.msra.mxu0 0.0
      %675 = vmatpush.msra.mxu0 0.0
      %676 = vmatpush.msra.mxu0 0.0
      %677 = vmatpush.msra.mxu0 0.0
      %678 = vmatpush.msra.mxu0 %v610
      %679 = vmatpush.msra.mxu0 %v609
      %680 = vmatmul.f32.gmra.mxu0 %v617
      %v681 = vpop.f32.mrf.mxu0
      %v682 = vadd.f32 %v613, %v681
      %683 = vmatmul.f32.gmra.mxu0 %v620
      %v684 = vpop.f32.mrf.mxu0
      %v685 = vadd.f32 %v613, %v684
      %686 = vmatmul.f32.gmra.mxu0 %v623
      %v687 = vpop.f32.mrf.mxu0
      %v688 = vadd.f32 %v613, %v687
      %689 = vmatmul.f32.gmra.mxu0 %v626
      %v690 = vpop.f32.mrf.mxu0
      %v691 = vadd.f32 %v613, %v690
      %692 = vmatmul.f32.gmra.mxu0 %v629
      %v693 = vpop.f32.mrf.mxu0
      %v694 = vadd.f32 %v613, %v693
      %695 = vmatmul.f32.gmra.mxu0 %v632
      %v696 = vpop.f32.mrf.mxu0
      %v697 = vadd.f32 %v613, %v696
      %698 = vmatmul.f32.gmra.mxu0 %v635
      %v699 = vpop.f32.mrf.mxu0
      %v700 = vadd.f32 %v613, %v699
      %701 = vmatmul.f32.gmra.mxu0 %v638
      %v702 = vpop.f32.mrf.mxu0
      %v703 = vadd.f32 %v613, %v702
      %704 = vmatmul.f32.gmra.mxu0 %v641
      %v705 = vpop.f32.mrf.mxu0
      %v706 = vadd.f32 %v613, %v705
      %707 = vmatmul.f32.gmra.mxu0 %v644
      %v708 = vpop.f32.mrf.mxu0
      %v709 = vadd.f32 %v613, %v708
      %710 = vmatmul.f32.gmra.mxu0 %v647
      %v711 = vpop.f32.mrf.mxu0
      %v712 = vadd.f32 %v613, %v711
      %713 = vmatmul.f32.gmra.mxu0 %v650
      %v714 = vpop.f32.mrf.mxu0
      %v715 = vadd.f32 %v613, %v714
      %716 = vmatmul.f32.gmra.mxu0 %v653
      %v717 = vpop.f32.mrf.mxu0
      %v718 = vadd.f32 %v613, %v717
      %719 = vmatmul.f32.gmra.mxu0 %v656
      %v720 = vpop.f32.mrf.mxu0
      %v721 = vadd.f32 %v613, %v720
      %722 = vmatmul.f32.gmra.mxu0 %v659
      %v723 = vpop.f32.mrf.mxu0
      %v724 = vadd.f32 %v613, %v723
      %725 = vmatmul.f32.gmra.mxu0 %v662
      %v726 = vpop.f32.mrf.mxu0
      %v727 = vadd.f32 %v613, %v726
      %728 = vdwg.mxu0
      %v729 = vtanh.pop %v682
      %v730 = vtanh.pop %v685
      %v731 = vtanh.pop %v688
      %v732 = vtanh.pop %v691
      %v733 = vtanh.pop %v694
      %v734 = vtanh.pop %v697
      %v735 = vtanh.pop %v700
      %v736 = vtanh.pop %v703
      %v737 = vtanh.pop %v706
      %v738 = vtanh.pop %v709
      %v739 = vtanh.pop %v712
      %v740 = vtanh.pop %v715
      %v741 = vtanh.pop %v718
      %v742 = vtanh.pop %v721
      %v743 = vtanh.pop %v724
      %v744 = vtanh.pop %v727
      %v745 = vld [vmem:[%s3] sm:$0xff]
      %v746 = vld [vmem:[%s3 + $0x8] sm:$0xff]
      %v747 = vld [vmem:[%s3 + $0x10] sm:$0xff]
      %v748 = vld [vmem:[%s3 + $0x18] sm:$0xff]
      %v749 = vld [vmem:[%s3 + $0x20] sm:$0xff]
      %v750 = vld [vmem:[%s3 + $0x28] sm:$0xff]
      %v751 = vld [vmem:[%s3 + $0x30] sm:$0xff]
      %v752 = vld [vmem:[%s3 + $0x38] sm:$0xf]
      %v753 = vld [vmem:[%s4] sm:$0x1]
      %v755 = vperm.slane %v753, 0
      %vm757 = vcmask 490496
      %v759 = vsel %vm757, %v729, 0
      %v762 = vsel %vm757, %v730, 0
      %v765 = vsel %vm757, %v731, 0
      %v768 = vsel %vm757, %v732, 0
      %v771 = vsel %vm757, %v733, 0
      %v774 = vsel %vm757, %v734, 0
      %v777 = vsel %vm757, %v735, 0
      %v780 = vsel %vm757, %v736, 0
      %v783 = vsel %vm757, %v737, 0
      %v786 = vsel %vm757, %v738, 0
      %v789 = vsel %vm757, %v739, 0
      %v792 = vsel %vm757, %v740, 0
      %v795 = vsel %vm757, %v741, 0
      %v798 = vsel %vm757, %v742, 0
      %v801 = vsel %vm757, %v743, 0
      %v804 = vsel %vm757, %v744, 0
      %vm806 = vcmask 1043456
      %v808 = vsel %vm806, %v752, 0
      %810 = vmatpush.msra.mxu0 0.0
      %811 = vmatpush.msra.mxu0 0.0
      %812 = vmatpush.msra.mxu0 0.0
      %813 = vmatpush.msra.mxu0 0.0
      %814 = vmatpush.msra.mxu0 0.0
      %815 = vmatpush.msra.mxu0 0.0
      %816 = vmatpush.msra.mxu0 0.0
      %817 = vmatpush.msra.mxu0 0.0
      %818 = vmatpush.msra.mxu0 %v808
      %819 = vmatpush.msra.mxu0 %v751
      %820 = vmatpush.msra.mxu0 %v750
      %821 = vmatpush.msra.mxu0 %v749
      %822 = vmatpush.msra.mxu0 %v748
      %823 = vmatpush.msra.mxu0 %v747
      %824 = vmatpush.msra.mxu0 %v746
      %825 = vmatpush.msra.mxu0 %v745
      %826 = vmatmul.f32.gmra.mxu0 %v759
      %v827 = vpop.f32.mrf.mxu0
      %v828 = vadd.f32 %v755, %v827
      %829 = vmatmul.f32.gmra.mxu0 %v762
      %v830 = vpop.f32.mrf.mxu0
      %v831 = vadd.f32 %v755, %v830
      %832 = vmatmul.f32.gmra.mxu0 %v765
      %v833 = vpop.f32.mrf.mxu0
      %v834 = vadd.f32 %v755, %v833
      %835 = vmatmul.f32.gmra.mxu0 %v768
      %v836 = vpop.f32.mrf.mxu0
      %v837 = vadd.f32 %v755, %v836
      %838 = vmatmul.f32.gmra.mxu0 %v771
      %v839 = vpop.f32.mrf.mxu0
      %v840 = vadd.f32 %v755, %v839
      %841 = vmatmul.f32.gmra.mxu0 %v774
      %v842 = vpop.f32.mrf.mxu0
      %v843 = vadd.f32 %v755, %v842
      %844 = vmatmul.f32.gmra.mxu0 %v777
      %v845 = vpop.f32.mrf.mxu0
      %v846 = vadd.f32 %v755, %v845
      %847 = vmatmul.f32.gmra.mxu0 %v780
      %v848 = vpop.f32.mrf.mxu0
      %v849 = vadd.f32 %v755, %v848
      %850 = vmatmul.f32.gmra.mxu0 %v783
      %v851 = vpop.f32.mrf.mxu0
      %v852 = vadd.f32 %v755, %v851
      %853 = vmatmul.f32.gmra.mxu0 %v786
      %v854 = vpop.f32.mrf.mxu0
      %v855 = vadd.f32 %v755, %v854
      %856 = vmatmul.f32.gmra.mxu0 %v789
      %v857 = vpop.f32.mrf.mxu0
      %v858 = vadd.f32 %v755, %v857
      %859 = vmatmul.f32.gmra.mxu0 %v792
      %v860 = vpop.f32.mrf.mxu0
      %v861 = vadd.f32 %v755, %v860
      %862 = vmatmul.f32.gmra.mxu0 %v795
      %v863 = vpop.f32.mrf.mxu0
      %v864 = vadd.f32 %v755, %v863
      %865 = vmatmul.f32.gmra.mxu0 %v798
      %v866 = vpop.f32.mrf.mxu0
      %v867 = vadd.f32 %v755, %v866
      %868 = vmatmul.f32.gmra.mxu0 %v801
      %v869 = vpop.f32.mrf.mxu0
      %v870 = vadd.f32 %v755, %v869
      %871 = vmatmul.f32.gmra.mxu0 %v804
      %v872 = vpop.f32.mrf.mxu0
      %v873 = vadd.f32 %v755, %v872
      %874 = vdwg.mxu0
      %v875 = vtanh.pop %v828
      %v876 = vtanh.pop %v831
      %v877 = vtanh.pop %v834
      %v878 = vtanh.pop %v837
      %v879 = vtanh.pop %v840
      %v880 = vtanh.pop %v843
      %v881 = vtanh.pop %v846
      %v882 = vtanh.pop %v849
      %v883 = vtanh.pop %v852
      %v884 = vtanh.pop %v855
      %v885 = vtanh.pop %v858
      %v886 = vtanh.pop %v861
      %v887 = vtanh.pop %v864
      %v888 = vtanh.pop %v867
      %v889 = vtanh.pop %v870
      %v890 = vtanh.pop %v873
      %v891 = vld [vmem:[%s5] sm:$0xff]
      %v892 = vld [vmem:[%s5 + $0x8] sm:$0xff]
      %v893 = vld [vmem:[%s5 + $0x10] sm:$0xff]
      %v894 = vld [vmem:[%s5 + $0x18] sm:$0x3f]
      %v895 = vld [vmem:[%s6] sm:$0x1]
      %v897 = vperm.slane %v895, 0
      %vm899 = vcmask 244736
      %v901 = vsel %vm899, %v875, 0
      %v904 = vsel %vm899, %v876, 0
      %v907 = vsel %vm899, %v877, 0
      %v910 = vsel %vm899, %v878, 0
      %v913 = vsel %vm899, %v879, 0
      %v916 = vsel %vm899, %v880, 0
      %v919 = vsel %vm899, %v881, 0
      %v922 = vsel %vm899, %v882, 0
      %v925 = vsel %vm899, %v883, 0
      %v928 = vsel %vm899, %v884, 0
      %v931 = vsel %vm899, %v885, 0
      %v934 = vsel %vm899, %v886, 0
      %v937 = vsel %vm899, %v887, 0
      %v940 = vsel %vm899, %v888, 0
      %v943 = vsel %vm899, %v889, 0
      %v946 = vsel %vm899, %v890, 0
      %vm948 = vcmask 1045504
      %v950 = vsel %vm948, %v894, 0
      %952 = vmatpush.msra.mxu0 0.0
      %953 = vmatpush.msra.mxu0 0.0
      %954 = vmatpush.msra.mxu0 0.0
      %955 = vmatpush.msra.mxu0 0.0
      %956 = vmatpush.msra.mxu0 0.0
      %957 = vmatpush.msra.mxu0 0.0
      %958 = vmatpush.msra.mxu0 0.0
      %959 = vmatpush.msra.mxu0 0.0
      %960 = vmatpush.msra.mxu0 0.0
      %961 = vmatpush.msra.mxu0 0.0
      %962 = vmatpush.msra.mxu0 0.0
      %963 = vmatpush.msra.mxu0 0.0
      %964 = vmatpush.msra.mxu0 %v950
      %965 = vmatpush.msra.mxu0 %v893
      %966 = vmatpush.msra.mxu0 %v892
      %967 = vmatpush.msra.mxu0 %v891
      %968 = vmatmul.f32.gmra.mxu0 %v901
      %v969 = vpop.f32.mrf.mxu0
      %v970 = vadd.f32 %v897, %v969
      %971 = vmatmul.f32.gmra.mxu0 %v904
      %v972 = vpop.f32.mrf.mxu0
      %v973 = vadd.f32 %v897, %v972
      %974 = vmatmul.f32.gmra.mxu0 %v907
      %v975 = vpop.f32.mrf.mxu0
      %v976 = vadd.f32 %v897, %v975
      %977 = vmatmul.f32.gmra.mxu0 %v910
      %v978 = vpop.f32.mrf.mxu0
      %v979 = vadd.f32 %v897, %v978
      %980 = vmatmul.f32.gmra.mxu0 %v913
      %v981 = vpop.f32.mrf.mxu0
      %v982 = vadd.f32 %v897, %v981
      %983 = vmatmul.f32.gmra.mxu0 %v916
      %v984 = vpop.f32.mrf.mxu0
      %v985 = vadd.f32 %v897, %v984
      %986 = vmatmul.f32.gmra.mxu0 %v919
      %v987 = vpop.f32.mrf.mxu0
      %v988 = vadd.f32 %v897, %v987
      %989 = vmatmul.f32.gmra.mxu0 %v922
      %v990 = vpop.f32.mrf.mxu0
      %v991 = vadd.f32 %v897, %v990
      %992 = vmatmul.f32.gmra.mxu0 %v925
      %v993 = vpop.f32.mrf.mxu0
      %v994 = vadd.f32 %v897, %v993
      %995 = vmatmul.f32.gmra.mxu0 %v928
      %v996 = vpop.f32.mrf.mxu0
      %v997 = vadd.f32 %v897, %v996
      %998 = vmatmul.f32.gmra.mxu0 %v931
      %v999 = vpop.f32.mrf.mxu0
      %v1000 = vadd.f32 %v897, %v999
      %1001 = vmatmul.f32.gmra.mxu0 %v934
      %v1002 = vpop.f32.mrf.mxu0
      %v1003 = vadd.f32 %v897, %v1002
      %1004 = vmatmul.f32.gmra.mxu0 %v937
      %v1005 = vpop.f32.mrf.mxu0
      %v1006 = vadd.f32 %v897, %v1005
      %1007 = vmatmul.f32.gmra.mxu0 %v940
      %v1008 = vpop.f32.mrf.mxu0
      %v1009 = vadd.f32 %v897, %v1008
      %1010 = vmatmul.f32.gmra.mxu0 %v943
      %v1011 = vpop.f32.mrf.mxu0
      %v1012 = vadd.f32 %v897, %v1011
      %1013 = vmatmul.f32.gmra.mxu0 %v946
      %v1014 = vpop.f32.mrf.mxu0
      %v1015 = vadd.f32 %v897, %v1014
      %1016 = vdwg.mxu0
      %v1017 = vtanh.pop %v970
      %v1018 = vtanh.pop %v973
      %v1019 = vtanh.pop %v976
      %v1020 = vtanh.pop %v979
      %v1021 = vtanh.pop %v982
      %v1022 = vtanh.pop %v985
      %v1023 = vtanh.pop %v988
      %v1024 = vtanh.pop %v991
      %v1025 = vtanh.pop %v994
      %v1026 = vtanh.pop %v997
      %v1027 = vtanh.pop %v1000
      %v1028 = vtanh.pop %v1003
      %v1029 = vtanh.pop %v1006
      %v1030 = vtanh.pop %v1009
      %v1031 = vtanh.pop %v1012
      %v1032 = vtanh.pop %v1015
      %v1033 = vld [vmem:[%s7] sm:$0xff]
      %v1034 = vld [vmem:[%s7 + $0x8] sm:$0x3]
      %v1035 = vld [vmem:[%s8] sm:$0x1]
      %v1037 = vperm.slane %v1035, 0
      %vm1039 = vcmask 80896
      %v1041 = vsel %vm1039, %v1017, 0
      %v1044 = vsel %vm1039, %v1018, 0
      %v1047 = vsel %vm1039, %v1019, 0
      %v1050 = vsel %vm1039, %v1020, 0
      %v1053 = vsel %vm1039, %v1021, 0
      %v1056 = vsel %vm1039, %v1022, 0
      %v1059 = vsel %vm1039, %v1023, 0
      %v1062 = vsel %vm1039, %v1024, 0
      %v1065 = vsel %vm1039, %v1025, 0
      %v1068 = vsel %vm1039, %v1026, 0
      %v1071 = vsel %vm1039, %v1027, 0
      %v1074 = vsel %vm1039, %v1028, 0
      %v1077 = vsel %vm1039, %v1029, 0
      %v1080 = vsel %vm1039, %v1030, 0
      %v1083 = vsel %vm1039, %v1031, 0
      %v1086 = vsel %vm1039, %v1032, 0
      %vm1088 = vcmask 1041408
      %v1090 = vsel %vm1088, %v1034, 0
      %1092 = vmatpush.msra.mxu0 0.0
      %1093 = vmatpush.msra.mxu0 0.0
      %1094 = vmatpush.msra.mxu0 0.0
      %1095 = vmatpush.msra.mxu0 0.0
      %1096 = vmatpush.msra.mxu0 0.0
      %1097 = vmatpush.msra.mxu0 0.0
      %1098 = vmatpush.msra.mxu0 0.0
      %1099 = vmatpush.msra.mxu0 0.0
      %1100 = vmatpush.msra.mxu0 0.0
      %1101 = vmatpush.msra.mxu0 0.0
      %1102 = vmatpush.msra.mxu0 0.0
      %1103 = vmatpush.msra.mxu0 0.0
      %1104 = vmatpush.msra.mxu0 0.0
      %1105 = vmatpush.msra.mxu0 0.0
      %1106 = vmatpush.msra.mxu0 %v1090
      %1107 = vmatpush.msra.mxu0 %v1033
      %1108 = vmatmul.f32.gmra.mxu0 %v1041
      %v1109 = vpop.f32.mrf.mxu0
      %v1110 = vadd.f32 %v1037, %v1109
      %1111 = vmatmul.f32.gmra.mxu0 %v1044
      %v1112 = vpop.f32.mrf.mxu0
      %v1113 = vadd.f32 %v1037, %v1112
      %1114 = vmatmul.f32.gmra.mxu0 %v1047
      %v1115 = vpop.f32.mrf.mxu0
      %v1116 = vadd.f32 %v1037, %v1115
      %1117 = vmatmul.f32.gmra.mxu0 %v1050
      %v1118 = vpop.f32.mrf.mxu0
      %v1119 = vadd.f32 %v1037, %v1118
      %1120 = vmatmul.f32.gmra.mxu0 %v1053
      %v1121 = vpop.f32.mrf.mxu0
      %v1122 = vadd.f32 %v1037, %v1121
      %1123 = vmatmul.f32.gmra.mxu0 %v1056
      %v1124 = vpop.f32.mrf.mxu0
      %v1125 = vadd.f32 %v1037, %v1124
      %1126 = vmatmul.f32.gmra.mxu0 %v1059
      %v1127 = vpop.f32.mrf.mxu0
      %v1128 = vadd.f32 %v1037, %v1127
      %1129 = vmatmul.f32.gmra.mxu0 %v1062
      %v1130 = vpop.f32.mrf.mxu0
      %v1131 = vadd.f32 %v1037, %v1130
      %1132 = vmatmul.f32.gmra.mxu0 %v1065
      %v1133 = vpop.f32.mrf.mxu0
      %v1134 = vadd.f32 %v1037, %v1133
      %1135 = vmatmul.f32.gmra.mxu0 %v1068
      %v1136 = vpop.f32.mrf.mxu0
      %v1137 = vadd.f32 %v1037, %v1136
      %1138 = vmatmul.f32.gmra.mxu0 %v1071
      %v1139 = vpop.f32.mrf.mxu0
      %v1140 = vadd.f32 %v1037, %v1139
      %1141 = vmatmul.f32.gmra.mxu0 %v1074
      %v1142 = vpop.f32.mrf.mxu0
      %v1143 = vadd.f32 %v1037, %v1142
      %1144 = vmatmul.f32.gmra.mxu0 %v1077
      %v1145 = vpop.f32.mrf.mxu0
      %v1146 = vadd.f32 %v1037, %v1145
      %1147 = vmatmul.f32.gmra.mxu0 %v1080
      %v1148 = vpop.f32.mrf.mxu0
      %v1149 = vadd.f32 %v1037, %v1148
      %1150 = vmatmul.f32.gmra.mxu0 %v1083
      %v1151 = vpop.f32.mrf.mxu0
      %v1152 = vadd.f32 %v1037, %v1151
      %1153 = vmatmul.f32.gmra.mxu0 %v1086
      %v1154 = vpop.f32.mrf.mxu0
      %v1155 = vadd.f32 %v1037, %v1154
      %1156 = vdwg.mxu0
      %1157 = vmax.xlane.f32.xlu0 %v1110
      %v1158 = vpop.xlane.xlu0 %1157
      %1159 = vmax.xlane.f32.xlu0 %v1113
      %v1160 = vpop.xlane.xlu0 %1159
      %1161 = vmax.xlane.f32.xlu0 %v1116
      %v1162 = vpop.xlane.xlu0 %1161
      %1163 = vmax.xlane.f32.xlu0 %v1119
      %v1164 = vpop.xlane.xlu0 %1163
      %1165 = vmax.xlane.f32.xlu0 %v1122
      %v1166 = vpop.xlane.xlu0 %1165
      %1167 = vmax.xlane.f32.xlu0 %v1125
      %v1168 = vpop.xlane.xlu0 %1167
      %1169 = vmax.xlane.f32.xlu0 %v1128
      %v1170 = vpop.xlane.xlu0 %1169
      %1171 = vmax.xlane.f32.xlu0 %v1131
      %v1172 = vpop.xlane.xlu0 %1171
      %1173 = vmax.xlane.f32.xlu0 %v1134
      %v1174 = vpop.xlane.xlu0 %1173
      %1175 = vmax.xlane.f32.xlu0 %v1137
      %v1176 = vpop.xlane.xlu0 %1175
      %1177 = vmax.xlane.f32.xlu0 %v1140
      %v1178 = vpop.xlane.xlu0 %1177
      %1179 = vmax.xlane.f32.xlu0 %v1143
      %v1180 = vpop.xlane.xlu0 %1179
      %1181 = vmax.xlane.f32.xlu0 %v1146
      %v1182 = vpop.xlane.xlu0 %1181
      %1183 = vmax.xlane.f32.xlu0 %v1149
      %v1184 = vpop.xlane.xlu0 %1183
      %1185 = vmax.xlane.f32.xlu0 %v1152
      %v1186 = vpop.xlane.xlu0 %1185
      %1187 = vmax.xlane.f32.xlu0 %v1155
      %v1188 = vpop.xlane.xlu0 %1187
      %v1189 = vsub.f32 %v1110, %v1158
      %v1190 = vsub.f32 %v1113, %v1160
      %v1191 = vsub.f32 %v1116, %v1162
      %v1192 = vsub.f32 %v1119, %v1164
      %v1193 = vsub.f32 %v1122, %v1166
      %v1194 = vsub.f32 %v1125, %v1168
      %v1195 = vsub.f32 %v1128, %v1170
      %v1196 = vsub.f32 %v1131, %v1172
      %v1197 = vsub.f32 %v1134, %v1174
      %v1198 = vsub.f32 %v1137, %v1176
      %v1199 = vsub.f32 %v1140, %v1178
      %v1200 = vsub.f32 %v1143, %v1180
      %v1201 = vsub.f32 %v1146, %v1182
      %v1202 = vsub.f32 %v1149, %v1184
      %v1203 = vsub.f32 %v1152, %v1186
      %v1204 = vsub.f32 %v1155, %v1188
      %v1205 = vmul.f32 %v1189, 1.442695
      %v1206 = vpow.pop %v1205
      %v1207 = vmul.f32 %v1190, 1.442695
      %v1208 = vpow.pop %v1207
      %v1209 = vmul.f32 %v1191, 1.442695
      %v1210 = vpow.pop %v1209
      %v1211 = vmul.f32 %v1192, 1.442695
      %v1212 = vpow.pop %v1211
      %v1213 = vmul.f32 %v1193, 1.442695
      %v1214 = vpow.pop %v1213
      %v1215 = vmul.f32 %v1194, 1.442695
      %v1216 = vpow.pop %v1215
      %v1217 = vmul.f32 %v1195, 1.442695
      %v1218 = vpow.pop %v1217
      %v1219 = vmul.f32 %v1196, 1.442695
      %v1220 = vpow.pop %v1219
      %v1221 = vmul.f32 %v1197, 1.442695
      %v1222 = vpow.pop %v1221
      %v1223 = vmul.f32 %v1198, 1.442695
      %v1224 = vpow.pop %v1223
      %v1225 = vmul.f32 %v1199, 1.442695
      %v1226 = vpow.pop %v1225
      %v1227 = vmul.f32 %v1200, 1.442695
      %v1228 = vpow.pop %v1227
      %v1229 = vmul.f32 %v1201, 1.442695
      %v1230 = vpow.pop %v1229
      %v1231 = vmul.f32 %v1202, 1.442695
      %v1232 = vpow.pop %v1231
      %v1233 = vmul.f32 %v1203, 1.442695
      %v1234 = vpow.pop %v1233
      %v1235 = vmul.f32 %v1204, 1.442695
      %v1236 = vpow.pop %v1235
      %1237 = vadd.xlane.f32.xlu0 %v1206
      %v1238 = vpop.xlane.xlu0 %1237
      %1239 = vadd.xlane.f32.xlu0 %v1208
      %v1240 = vpop.xlane.xlu0 %1239
      %1241 = vadd.xlane.f32.xlu0 %v1210
      %v1242 = vpop.xlane.xlu0 %1241
      %1243 = vadd.xlane.f32.xlu0 %v1212
      %v1244 = vpop.xlane.xlu0 %1243
      %1245 = vadd.xlane.f32.xlu0 %v1214
      %v1246 = vpop.xlane.xlu0 %1245
      %1247 = vadd.xlane.f32.xlu0 %v1216
      %v1248 = vpop.xlane.xlu0 %1247
      %1249 = vadd.xlane.f32.xlu0 %v1218
      %v1250 = vpop.xlane.xlu0 %1249
      %1251 = vadd.xlane.f32.xlu0 %v1220
      %v1252 = vpop.xlane.xlu0 %1251
      %1253 = vadd.xlane.f32.xlu0 %v1222
      %v1254 = vpop.xlane.xlu0 %1253
      %1255 = vadd.xlane.f32.xlu0 %v1224
      %v1256 = vpop.xlane.xlu0 %1255
      %1257 = vadd.xlane.f32.xlu0 %v1226
      %v1258 = vpop.xlane.xlu0 %1257
      %1259 = vadd.xlane.f32.xlu0 %v1228
      %v1260 = vpop.xlane.xlu0 %1259
      %1261 = vadd.xlane.f32.xlu0 %v1230
      %v1262 = vpop.xlane.xlu0 %1261
      %1263 = vadd.xlane.f32.xlu0 %v1232
      %v1264 = vpop.xlane.xlu0 %1263
      %1265 = vadd.xlane.f32.xlu0 %v1234
      %v1266 = vpop.xlane.xlu0 %1265
      %1267 = vadd.xlane.f32.xlu0 %v1236
      %v1268 = vpop.xlane.xlu0 %1267
      %v1269 = vrcp.pop %v1238
      %v1270 = vrcp.pop %v1240
      %v1271 = vrcp.pop %v1242
      %v1272 = vrcp.pop %v1244
      %v1273 = vrcp.pop %v1246
      %v1274 = vrcp.pop %v1248
      %v1275 = vrcp.pop %v1250
      %v1276 = vrcp.pop %v1252
      %v1277 = vrcp.pop %v1254
      %v1278 = vrcp.pop %v1256
      %v1279 = vrcp.pop %v1258
      %v1280 = vrcp.pop %v1260
      %v1281 = vrcp.pop %v1262
      %v1282 = vrcp.pop %v1264
      %v1283 = vrcp.pop %v1266
      %v1284 = vrcp.pop %v1268
      %v1285 = vmul.f32 %v1206, %v1269
      %v1286 = vmul.f32 %v1208, %v1270
      %v1287 = vmul.f32 %v1210, %v1271
      %v1288 = vmul.f32 %v1212, %v1272
      %v1289 = vmul.f32 %v1214, %v1273
      %v1290 = vmul.f32 %v1216, %v1274
      %v1291 = vmul.f32 %v1218, %v1275
      %v1292 = vmul.f32 %v1220, %v1276
      %v1293 = vmul.f32 %v1222, %v1277
      %v1294 = vmul.f32 %v1224, %v1278
      %v1295 = vmul.f32 %v1226, %v1279
      %v1296 = vmul.f32 %v1228, %v1280
      %v1297 = vmul.f32 %v1230, %v1281
      %v1298 = vmul.f32 %v1232, %v1282
      %v1299 = vmul.f32 %v1234, %v1283
      %v1300 = vmul.f32 %v1236, %v1284
      %v1301 = vsub.f32 %v1285, 0.0025
      %v1302 = vsub.f32 %v1286, 0.0025
      %v1303 = vsub.f32 %v1287, 0.0025
      %v1304 = vsub.f32 %v1288, 0.0025
      %v1305 = vsub.f32 %v1289, 0.0025
      %v1306 = vsub.f32 %v1290, 0.0025
      %v1307 = vsub.f32 %v1291, 0.0025
      %v1308 = vsub.f32 %v1292, 0.0025
      %v1309 = vsub.f32 %v1293, 0.0025
      %v1310 = vsub.f32 %v1294, 0.0025
      %v1311 = vsub.f32 %v1295, 0.0025
      %v1312 = vsub.f32 %v1296, 0.0025
      %v1313 = vsub.f32 %v1297, 0.0025
      %v1314 = vsub.f32 %v1298, 0.0025
      %v1315 = vsub.f32 %v1299, 0.0025
      %v1316 = vsub.f32 %v1300, 0.0025
      %v1317 = vmax.f32 %v1301, 0.0
      %v1318 = vmax.f32 %v1302, 0.0
      %v1319 = vmax.f32 %v1303, 0.0
      %v1320 = vmax.f32 %v1304, 0.0
      %v1321 = vmax.f32 %v1305, 0.0
      %v1322 = vmax.f32 %v1306, 0.0
      %v1323 = vmax.f32 %v1307, 0.0
      %v1324 = vmax.f32 %v1308, 0.0
      %v1325 = vmax.f32 %v1309, 0.0
      %v1326 = vmax.f32 %v1310, 0.0
      %v1327 = vmax.f32 %v1311, 0.0
      %v1328 = vmax.f32 %v1312, 0.0
      %v1329 = vmax.f32 %v1313, 0.0
      %v1330 = vmax.f32 %v1314, 0.0
      %v1331 = vmax.f32 %v1315, 0.0
      %v1332 = vmax.f32 %v1316, 0.0
      %v1333 = vmul.f32 %v1317, %v1285
      %v1334 = vmul.f32 %v1318, %v1286
      %v1335 = vmul.f32 %v1319, %v1287
      %v1336 = vmul.f32 %v1320, %v1288
      %v1337 = vmul.f32 %v1321, %v1289
      %v1338 = vmul.f32 %v1322, %v1290
      %v1339 = vmul.f32 %v1323, %v1291
      %v1340 = vmul.f32 %v1324, %v1292
      %v1341 = vmul.f32 %v1325, %v1293
      %v1342 = vmul.f32 %v1326, %v1294
      %v1343 = vmul.f32 %v1327, %v1295
      %v1344 = vmul.f32 %v1328, %v1296
      %v1345 = vmul.f32 %v1329, %v1297
      %v1346 = vmul.f32 %v1330, %v1298
      %v1347 = vmul.f32 %v1331, %v1299
      %v1348 = vmul.f32 %v1332, %v1300
      %v1349 = vand.u32 2147483647, %v1301
      %v1350 = vand.u32 2147483647, %v1302
      %v1351 = vand.u32 2147483647, %v1303
      %v1352 = vand.u32 2147483647, %v1304
      %v1353 = vand.u32 2147483647, %v1305
      %v1354 = vand.u32 2147483647, %v1306
      %v1355 = vand.u32 2147483647, %v1307
      %v1356 = vand.u32 2147483647, %v1308
      %v1357 = vand.u32 2147483647, %v1309
      %v1358 = vand.u32 2147483647, %v1310
      %v1359 = vand.u32 2147483647, %v1311
      %v1360 = vand.u32 2147483647, %v1312
      %v1361 = vand.u32 2147483647, %v1313
      %v1362 = vand.u32 2147483647, %v1314
      %v1363 = vand.u32 2147483647, %v1315
      %v1364 = vand.u32 2147483647, %v1316
      %v1365 = vadd.f32 %v1349, 1e-12
      %v1366 = vadd.f32 %v1350, 1e-12
      %v1367 = vadd.f32 %v1351, 1e-12
      %v1368 = vadd.f32 %v1352, 1e-12
      %v1369 = vadd.f32 %v1353, 1e-12
      %v1370 = vadd.f32 %v1354, 1e-12
      %v1371 = vadd.f32 %v1355, 1e-12
      %v1372 = vadd.f32 %v1356, 1e-12
      %v1373 = vadd.f32 %v1357, 1e-12
      %v1374 = vadd.f32 %v1358, 1e-12
      %v1375 = vadd.f32 %v1359, 1e-12
      %v1376 = vadd.f32 %v1360, 1e-12
      %v1377 = vadd.f32 %v1361, 1e-12
      %v1378 = vadd.f32 %v1362, 1e-12
      %v1379 = vadd.f32 %v1363, 1e-12
      %v1380 = vadd.f32 %v1364, 1e-12
      %v1381 = vrcp.pop %v1365
      %v1382 = vrcp.pop %v1366
      %v1383 = vrcp.pop %v1367
      %v1384 = vrcp.pop %v1368
      %v1385 = vrcp.pop %v1369
      %v1386 = vrcp.pop %v1370
      %v1387 = vrcp.pop %v1371
      %v1388 = vrcp.pop %v1372
      %v1389 = vrcp.pop %v1373
      %v1390 = vrcp.pop %v1374
      %v1391 = vrcp.pop %v1375
      %v1392 = vrcp.pop %v1376
      %v1393 = vrcp.pop %v1377
      %v1394 = vrcp.pop %v1378
      %v1395 = vrcp.pop %v1379
      %v1396 = vrcp.pop %v1380
      %v1397 = vmul.f32 %v1333, %v1381
      %v1398 = vmul.f32 %v1334, %v1382
      %v1399 = vmul.f32 %v1335, %v1383
      %v1400 = vmul.f32 %v1336, %v1384
      %v1401 = vmul.f32 %v1337, %v1385
      %v1402 = vmul.f32 %v1338, %v1386
      %v1403 = vmul.f32 %v1339, %v1387
      %v1404 = vmul.f32 %v1340, %v1388
      %v1405 = vmul.f32 %v1341, %v1389
      %v1406 = vmul.f32 %v1342, %v1390
      %v1407 = vmul.f32 %v1343, %v1391
      %v1408 = vmul.f32 %v1344, %v1392
      %v1409 = vmul.f32 %v1345, %v1393
      %v1410 = vmul.f32 %v1346, %v1394
      %v1411 = vmul.f32 %v1347, %v1395
      %v1412 = vmul.f32 %v1348, %v1396
      %v1413 = vand.u32 2147483647, %v1397
      %v1414 = vand.u32 2147483647, %v1398
      %v1415 = vand.u32 2147483647, %v1399
      %v1416 = vand.u32 2147483647, %v1400
      %v1417 = vand.u32 2147483647, %v1401
      %v1418 = vand.u32 2147483647, %v1402
      %v1419 = vand.u32 2147483647, %v1403
      %v1420 = vand.u32 2147483647, %v1404
      %v1421 = vand.u32 2147483647, %v1405
      %v1422 = vand.u32 2147483647, %v1406
      %v1423 = vand.u32 2147483647, %v1407
      %v1424 = vand.u32 2147483647, %v1408
      %v1425 = vand.u32 2147483647, %v1409
      %v1426 = vand.u32 2147483647, %v1410
      %v1427 = vand.u32 2147483647, %v1411
      %v1428 = vand.u32 2147483647, %v1412
      %1429 = vadd.xlane.f32.xlu0 %v1413
      %v1430 = vpop.xlane.xlu0 %1429
      %1431 = vadd.xlane.f32.xlu0 %v1414
      %v1432 = vpop.xlane.xlu0 %1431
      %1433 = vadd.xlane.f32.xlu0 %v1415
      %v1434 = vpop.xlane.xlu0 %1433
      %1435 = vadd.xlane.f32.xlu0 %v1416
      %v1436 = vpop.xlane.xlu0 %1435
      %1437 = vadd.xlane.f32.xlu0 %v1417
      %v1438 = vpop.xlane.xlu0 %1437
      %1439 = vadd.xlane.f32.xlu0 %v1418
      %v1440 = vpop.xlane.xlu0 %1439
      %1441 = vadd.xlane.f32.xlu0 %v1419
      %v1442 = vpop.xlane.xlu0 %1441
      %1443 = vadd.xlane.f32.xlu0 %v1420
      %v1444 = vpop.xlane.xlu0 %1443
      %1445 = vadd.xlane.f32.xlu0 %v1421
      %v1446 = vpop.xlane.xlu0 %1445
      %1447 = vadd.xlane.f32.xlu0 %v1422
      %v1448 = vpop.xlane.xlu0 %1447
      %1449 = vadd.xlane.f32.xlu0 %v1423
      %v1450 = vpop.xlane.xlu0 %1449
      %1451 = vadd.xlane.f32.xlu0 %v1424
      %v1452 = vpop.xlane.xlu0 %1451
      %1453 = vadd.xlane.f32.xlu0 %v1425
      %v1454 = vpop.xlane.xlu0 %1453
      %1455 = vadd.xlane.f32.xlu0 %v1426
      %v1456 = vpop.xlane.xlu0 %1455
      %1457 = vadd.xlane.f32.xlu0 %v1427
      %v1458 = vpop.xlane.xlu0 %1457
      %1459 = vadd.xlane.f32.xlu0 %v1428
      %v1460 = vpop.xlane.xlu0 %1459
      %v1461 = vmax.f32 %v1430, 1e-12
      %v1462 = vmax.f32 %v1432, 1e-12
      %v1463 = vmax.f32 %v1434, 1e-12
      %v1464 = vmax.f32 %v1436, 1e-12
      %v1465 = vmax.f32 %v1438, 1e-12
      %v1466 = vmax.f32 %v1440, 1e-12
      %v1467 = vmax.f32 %v1442, 1e-12
      %v1468 = vmax.f32 %v1444, 1e-12
      %v1469 = vmax.f32 %v1446, 1e-12
      %v1470 = vmax.f32 %v1448, 1e-12
      %v1471 = vmax.f32 %v1450, 1e-12
      %v1472 = vmax.f32 %v1452, 1e-12
      %v1473 = vmax.f32 %v1454, 1e-12
      %v1474 = vmax.f32 %v1456, 1e-12
      %v1475 = vmax.f32 %v1458, 1e-12
      %v1476 = vmax.f32 %v1460, 1e-12
      %v1477 = vrcp.pop %v1461
      %v1478 = vrcp.pop %v1462
      %v1479 = vrcp.pop %v1463
      %v1480 = vrcp.pop %v1464
      %v1481 = vrcp.pop %v1465
      %v1482 = vrcp.pop %v1466
      %v1483 = vrcp.pop %v1467
      %v1484 = vrcp.pop %v1468
      %v1485 = vrcp.pop %v1469
      %v1486 = vrcp.pop %v1470
      %v1487 = vrcp.pop %v1471
      %v1488 = vrcp.pop %v1472
      %v1489 = vrcp.pop %v1473
      %v1490 = vrcp.pop %v1474
      %v1491 = vrcp.pop %v1475
      %v1492 = vrcp.pop %v1476
      %v1493 = vmul.f32 %v1397, %v1477
      %v1494 = vmul.f32 %v1398, %v1478
      %v1495 = vmul.f32 %v1399, %v1479
      %v1496 = vmul.f32 %v1400, %v1480
      %v1497 = vmul.f32 %v1401, %v1481
      %v1498 = vmul.f32 %v1402, %v1482
      %v1499 = vmul.f32 %v1403, %v1483
      %v1500 = vmul.f32 %v1404, %v1484
      %v1501 = vmul.f32 %v1405, %v1485
      %v1502 = vmul.f32 %v1406, %v1486
      %v1503 = vmul.f32 %v1407, %v1487
      %v1504 = vmul.f32 %v1408, %v1488
      %v1505 = vmul.f32 %v1409, %v1489
      %v1506 = vmul.f32 %v1410, %v1490
      %v1507 = vmul.f32 %v1411, %v1491
      %v1508 = vmul.f32 %v1412, %v1492
      %v1509 = vld [vmem:[%s9] sm:$0xff]
      %v1510 = vld [vmem:[%s9 + $0x8] sm:$0xff]
      %v1511 = vld [vmem:[%s9 + $0x10] sm:$0xff]
      %v1512 = vld [vmem:[%s9 + $0x18] sm:$0xff]
      %v1513 = vld [vmem:[%s9 + $0x20] sm:$0xff]
      %v1514 = vld [vmem:[%s9 + $0x28] sm:$0xff]
      %v1515 = vld [vmem:[%s9 + $0x30] sm:$0xff]
      %v1516 = vld [vmem:[%s9 + $0x38] sm:$0xff]
      %v1517 = vld [vmem:[%s9 + $0x40] sm:$0xff]
      %v1518 = vld [vmem:[%s9 + $0x48] sm:$0xff]
      %v1519 = vld [vmem:[%s9 + $0x50] sm:$0xff]
      %v1520 = vld [vmem:[%s9 + $0x58] sm:$0xff]
      %v1521 = vld [vmem:[%s9 + $0x60] sm:$0xff]
      %v1522 = vld [vmem:[%s9 + $0x68] sm:$0xff]
      %v1523 = vld [vmem:[%s9 + $0x70] sm:$0xff]
      %v1524 = vld [vmem:[%s9 + $0x78] sm:$0xff]
      %v1525 = vld [vmem:[%s10] sm:$0x1]
      %v1527 = vperm.slane %v1525, 0
      %1529 = vmatpush.msra.mxu0 %v1524
      %1530 = vmatpush.msra.mxu0 %v1523
      %1531 = vmatpush.msra.mxu0 %v1522
      %1532 = vmatpush.msra.mxu0 %v1521
      %1533 = vmatpush.msra.mxu0 %v1520
      %1534 = vmatpush.msra.mxu0 %v1519
      %1535 = vmatpush.msra.mxu0 %v1518
      %1536 = vmatpush.msra.mxu0 %v1517
      %1537 = vmatpush.msra.mxu0 %v1516
      %1538 = vmatpush.msra.mxu0 %v1515
      %1539 = vmatpush.msra.mxu0 %v1514
      %1540 = vmatpush.msra.mxu0 %v1513
      %1541 = vmatpush.msra.mxu0 %v1512
      %1542 = vmatpush.msra.mxu0 %v1511
      %1543 = vmatpush.msra.mxu0 %v1510
      %1544 = vmatpush.msra.mxu0 %v1509
      %1545 = vmatmul.f32.gmra.mxu0 %v1493
      %v1546 = vpop.f32.mrf.mxu0
      %v1547 = vadd.f32 %v1527, %v1546
      %1548 = vmatmul.f32.gmra.mxu0 %v1494
      %v1549 = vpop.f32.mrf.mxu0
      %v1550 = vadd.f32 %v1527, %v1549
      %1551 = vmatmul.f32.gmra.mxu0 %v1495
      %v1552 = vpop.f32.mrf.mxu0
      %v1553 = vadd.f32 %v1527, %v1552
      %1554 = vmatmul.f32.gmra.mxu0 %v1496
      %v1555 = vpop.f32.mrf.mxu0
      %v1556 = vadd.f32 %v1527, %v1555
      %1557 = vmatmul.f32.gmra.mxu0 %v1497
      %v1558 = vpop.f32.mrf.mxu0
      %v1559 = vadd.f32 %v1527, %v1558
      %1560 = vmatmul.f32.gmra.mxu0 %v1498
      %v1561 = vpop.f32.mrf.mxu0
      %v1562 = vadd.f32 %v1527, %v1561
      %1563 = vmatmul.f32.gmra.mxu0 %v1499
      %v1564 = vpop.f32.mrf.mxu0
      %v1565 = vadd.f32 %v1527, %v1564
      %1566 = vmatmul.f32.gmra.mxu0 %v1500
      %v1567 = vpop.f32.mrf.mxu0
      %v1568 = vadd.f32 %v1527, %v1567
      %1569 = vmatmul.f32.gmra.mxu0 %v1501
      %v1570 = vpop.f32.mrf.mxu0
      %v1571 = vadd.f32 %v1527, %v1570
      %1572 = vmatmul.f32.gmra.mxu0 %v1502
      %v1573 = vpop.f32.mrf.mxu0
      %v1574 = vadd.f32 %v1527, %v1573
      %1575 = vmatmul.f32.gmra.mxu0 %v1503
      %v1576 = vpop.f32.mrf.mxu0
      %v1577 = vadd.f32 %v1527, %v1576
      %1578 = vmatmul.f32.gmra.mxu0 %v1504
      %v1579 = vpop.f32.mrf.mxu0
      %v1580 = vadd.f32 %v1527, %v1579
      %1581 = vmatmul.f32.gmra.mxu0 %v1505
      %v1582 = vpop.f32.mrf.mxu0
      %v1583 = vadd.f32 %v1527, %v1582
      %1584 = vmatmul.f32.gmra.mxu0 %v1506
      %v1585 = vpop.f32.mrf.mxu0
      %v1586 = vadd.f32 %v1527, %v1585
      %1587 = vmatmul.f32.gmra.mxu0 %v1507
      %v1588 = vpop.f32.mrf.mxu0
      %v1589 = vadd.f32 %v1527, %v1588
      %1590 = vmatmul.f32.gmra.mxu0 %v1508
      %v1591 = vpop.f32.mrf.mxu0
      %v1592 = vadd.f32 %v1527, %v1591
      %1593 = vdwg.mxu0
      %v1594 = vtanh.pop %v1547
      %v1595 = vtanh.pop %v1550
      %v1596 = vtanh.pop %v1553
      %v1597 = vtanh.pop %v1556
      %v1598 = vtanh.pop %v1559
      %v1599 = vtanh.pop %v1562
      %v1600 = vtanh.pop %v1565
      %v1601 = vtanh.pop %v1568
      %v1602 = vtanh.pop %v1571
      %v1603 = vtanh.pop %v1574
      %v1604 = vtanh.pop %v1577
      %v1605 = vtanh.pop %v1580
      %v1606 = vtanh.pop %v1583
      %v1607 = vtanh.pop %v1586
      %v1608 = vtanh.pop %v1589
      %v1609 = vtanh.pop %v1592
      %v1610 = vld [vmem:[%s11] sm:$0xff]
      %v1611 = vld [vmem:[%s11 + $0x8] sm:$0x3]
      %v1612 = vld [vmem:[%s12] sm:$0x1]
      %v1614 = vperm.slane %v1612, 0
      %v1617 = vsel %vm1039, %v1594, 0
      %v1620 = vsel %vm1039, %v1595, 0
      %v1623 = vsel %vm1039, %v1596, 0
      %v1626 = vsel %vm1039, %v1597, 0
      %v1629 = vsel %vm1039, %v1598, 0
      %v1632 = vsel %vm1039, %v1599, 0
      %v1635 = vsel %vm1039, %v1600, 0
      %v1638 = vsel %vm1039, %v1601, 0
      %v1641 = vsel %vm1039, %v1602, 0
      %v1644 = vsel %vm1039, %v1603, 0
      %v1647 = vsel %vm1039, %v1604, 0
      %v1650 = vsel %vm1039, %v1605, 0
      %v1653 = vsel %vm1039, %v1606, 0
      %v1656 = vsel %vm1039, %v1607, 0
      %v1659 = vsel %vm1039, %v1608, 0
      %v1662 = vsel %vm1039, %v1609, 0
      %v1665 = vsel %vm1088, %v1611, 0
      %1667 = vmatpush.msra.mxu0 0.0
      %1668 = vmatpush.msra.mxu0 0.0
      %1669 = vmatpush.msra.mxu0 0.0
      %1670 = vmatpush.msra.mxu0 0.0
      %1671 = vmatpush.msra.mxu0 0.0
      %1672 = vmatpush.msra.mxu0 0.0
      %1673 = vmatpush.msra.mxu0 0.0
      %1674 = vmatpush.msra.mxu0 0.0
      %1675 = vmatpush.msra.mxu0 0.0
      %1676 = vmatpush.msra.mxu0 0.0
      %1677 = vmatpush.msra.mxu0 0.0
      %1678 = vmatpush.msra.mxu0 0.0
      %1679 = vmatpush.msra.mxu0 0.0
      %1680 = vmatpush.msra.mxu0 0.0
      %1681 = vmatpush.msra.mxu0 %v1665
      %1682 = vmatpush.msra.mxu0 %v1610
      %1683 = vmatmul.f32.gmra.mxu0 %v1617
      %v1684 = vpop.f32.mrf.mxu0
      %v1685 = vadd.f32 %v1614, %v1684
      %1686 = vmatmul.f32.gmra.mxu0 %v1620
      %v1687 = vpop.f32.mrf.mxu0
      %v1688 = vadd.f32 %v1614, %v1687
      %1689 = vmatmul.f32.gmra.mxu0 %v1623
      %v1690 = vpop.f32.mrf.mxu0
      %v1691 = vadd.f32 %v1614, %v1690
      %1692 = vmatmul.f32.gmra.mxu0 %v1626
      %v1693 = vpop.f32.mrf.mxu0
      %v1694 = vadd.f32 %v1614, %v1693
      %1695 = vmatmul.f32.gmra.mxu0 %v1629
      %v1696 = vpop.f32.mrf.mxu0
      %v1697 = vadd.f32 %v1614, %v1696
      %1698 = vmatmul.f32.gmra.mxu0 %v1632
      %v1699 = vpop.f32.mrf.mxu0
      %v1700 = vadd.f32 %v1614, %v1699
      %1701 = vmatmul.f32.gmra.mxu0 %v1635
      %v1702 = vpop.f32.mrf.mxu0
      %v1703 = vadd.f32 %v1614, %v1702
      %1704 = vmatmul.f32.gmra.mxu0 %v1638
      %v1705 = vpop.f32.mrf.mxu0
      %v1706 = vadd.f32 %v1614, %v1705
      %1707 = vmatmul.f32.gmra.mxu0 %v1641
      %v1708 = vpop.f32.mrf.mxu0
      %v1709 = vadd.f32 %v1614, %v1708
      %1710 = vmatmul.f32.gmra.mxu0 %v1644
      %v1711 = vpop.f32.mrf.mxu0
      %v1712 = vadd.f32 %v1614, %v1711
      %1713 = vmatmul.f32.gmra.mxu0 %v1647
      %v1714 = vpop.f32.mrf.mxu0
      %v1715 = vadd.f32 %v1614, %v1714
      %1716 = vmatmul.f32.gmra.mxu0 %v1650
      %v1717 = vpop.f32.mrf.mxu0
      %v1718 = vadd.f32 %v1614, %v1717
      %1719 = vmatmul.f32.gmra.mxu0 %v1653
      %v1720 = vpop.f32.mrf.mxu0
      %v1721 = vadd.f32 %v1614, %v1720
      %1722 = vmatmul.f32.gmra.mxu0 %v1656
      %v1723 = vpop.f32.mrf.mxu0
      %v1724 = vadd.f32 %v1614, %v1723
      %1725 = vmatmul.f32.gmra.mxu0 %v1659
      %v1726 = vpop.f32.mrf.mxu0
      %v1727 = vadd.f32 %v1614, %v1726
      %1728 = vmatmul.f32.gmra.mxu0 %v1662
      %v1729 = vpop.f32.mrf.mxu0
      %v1730 = vadd.f32 %v1614, %v1729
      %1731 = vdwg.mxu0
      %v1732 = vtanh.pop %v1685
      %v1733 = vtanh.pop %v1688
      %v1734 = vtanh.pop %v1691
      %v1735 = vtanh.pop %v1694
      %v1736 = vtanh.pop %v1697
      %v1737 = vtanh.pop %v1700
      %v1738 = vtanh.pop %v1703
      %v1739 = vtanh.pop %v1706
      %v1740 = vtanh.pop %v1709
      %v1741 = vtanh.pop %v1712
      %v1742 = vtanh.pop %v1715
      %v1743 = vtanh.pop %v1718
      %v1744 = vtanh.pop %v1721
      %v1745 = vtanh.pop %v1724
      %v1746 = vtanh.pop %v1727
      %v1747 = vtanh.pop %v1730
      %v1748 = vld [vmem:[%s13] sm:$0xff]
      %v1749 = vld [vmem:[%s13 + $0x8] sm:$0xff]
      %v1750 = vld [vmem:[%s13 + $0x10] sm:$0xff]
      %v1751 = vld [vmem:[%s13 + $0x18] sm:$0x3f]
      %v1752 = vld [vmem:[%s14] sm:$0x1]
      %v1754 = vperm.slane %v1752, 0
      %v1757 = vsel %vm899, %v1732, 0
      %v1760 = vsel %vm899, %v1733, 0
      %v1763 = vsel %vm899, %v1734, 0
      %v1766 = vsel %vm899, %v1735, 0
      %v1769 = vsel %vm899, %v1736, 0
      %v1772 = vsel %vm899, %v1737, 0
      %v1775 = vsel %vm899, %v1738, 0
      %v1778 = vsel %vm899, %v1739, 0
      %v1781 = vsel %vm899, %v1740, 0
      %v1784 = vsel %vm899, %v1741, 0
      %v1787 = vsel %vm899, %v1742, 0
      %v1790 = vsel %vm899, %v1743, 0
      %v1793 = vsel %vm899, %v1744, 0
      %v1796 = vsel %vm899, %v1745, 0
      %v1799 = vsel %vm899, %v1746, 0
      %v1802 = vsel %vm899, %v1747, 0
      %v1805 = vsel %vm948, %v1751, 0
      %1807 = vmatpush.msra.mxu0 0.0
      %1808 = vmatpush.msra.mxu0 0.0
      %1809 = vmatpush.msra.mxu0 0.0
      %1810 = vmatpush.msra.mxu0 0.0
      %1811 = vmatpush.msra.mxu0 0.0
      %1812 = vmatpush.msra.mxu0 0.0
      %1813 = vmatpush.msra.mxu0 0.0
      %1814 = vmatpush.msra.mxu0 0.0
      %1815 = vmatpush.msra.mxu0 0.0
      %1816 = vmatpush.msra.mxu0 0.0
      %1817 = vmatpush.msra.mxu0 0.0
      %1818 = vmatpush.msra.mxu0 0.0
      %1819 = vmatpush.msra.mxu0 %v1805
      %1820 = vmatpush.msra.mxu0 %v1750
      %1821 = vmatpush.msra.mxu0 %v1749
      %1822 = vmatpush.msra.mxu0 %v1748
      %1823 = vmatmul.f32.gmra.mxu0 %v1757
      %v1824 = vpop.f32.mrf.mxu0
      %v1825 = vadd.f32 %v1754, %v1824
      %1826 = vmatmul.f32.gmra.mxu0 %v1760
      %v1827 = vpop.f32.mrf.mxu0
      %v1828 = vadd.f32 %v1754, %v1827
      %1829 = vmatmul.f32.gmra.mxu0 %v1763
      %v1830 = vpop.f32.mrf.mxu0
      %v1831 = vadd.f32 %v1754, %v1830
      %1832 = vmatmul.f32.gmra.mxu0 %v1766
      %v1833 = vpop.f32.mrf.mxu0
      %v1834 = vadd.f32 %v1754, %v1833
      %1835 = vmatmul.f32.gmra.mxu0 %v1769
      %v1836 = vpop.f32.mrf.mxu0
      %v1837 = vadd.f32 %v1754, %v1836
      %1838 = vmatmul.f32.gmra.mxu0 %v1772
      %v1839 = vpop.f32.mrf.mxu0
      %v1840 = vadd.f32 %v1754, %v1839
      %1841 = vmatmul.f32.gmra.mxu0 %v1775
      %v1842 = vpop.f32.mrf.mxu0
      %v1843 = vadd.f32 %v1754, %v1842
      %1844 = vmatmul.f32.gmra.mxu0 %v1778
      %v1845 = vpop.f32.mrf.mxu0
      %v1846 = vadd.f32 %v1754, %v1845
      %1847 = vmatmul.f32.gmra.mxu0 %v1781
      %v1848 = vpop.f32.mrf.mxu0
      %v1849 = vadd.f32 %v1754, %v1848
      %1850 = vmatmul.f32.gmra.mxu0 %v1784
      %v1851 = vpop.f32.mrf.mxu0
      %v1852 = vadd.f32 %v1754, %v1851
      %1853 = vmatmul.f32.gmra.mxu0 %v1787
      %v1854 = vpop.f32.mrf.mxu0
      %v1855 = vadd.f32 %v1754, %v1854
      %1856 = vmatmul.f32.gmra.mxu0 %v1790
      %v1857 = vpop.f32.mrf.mxu0
      %v1858 = vadd.f32 %v1754, %v1857
      %1859 = vmatmul.f32.gmra.mxu0 %v1793
      %v1860 = vpop.f32.mrf.mxu0
      %v1861 = vadd.f32 %v1754, %v1860
      %1862 = vmatmul.f32.gmra.mxu0 %v1796
      %v1863 = vpop.f32.mrf.mxu0
      %v1864 = vadd.f32 %v1754, %v1863
      %1865 = vmatmul.f32.gmra.mxu0 %v1799
      %v1866 = vpop.f32.mrf.mxu0
      %v1867 = vadd.f32 %v1754, %v1866
      %1868 = vmatmul.f32.gmra.mxu0 %v1802
      %v1869 = vpop.f32.mrf.mxu0
      %v1870 = vadd.f32 %v1754, %v1869
      %1871 = vdwg.mxu0
      %v1872 = vtanh.pop %v1825
      %v1873 = vtanh.pop %v1828
      %v1874 = vtanh.pop %v1831
      %v1875 = vtanh.pop %v1834
      %v1876 = vtanh.pop %v1837
      %v1877 = vtanh.pop %v1840
      %v1878 = vtanh.pop %v1843
      %v1879 = vtanh.pop %v1846
      %v1880 = vtanh.pop %v1849
      %v1881 = vtanh.pop %v1852
      %v1882 = vtanh.pop %v1855
      %v1883 = vtanh.pop %v1858
      %v1884 = vtanh.pop %v1861
      %v1885 = vtanh.pop %v1864
      %v1886 = vtanh.pop %v1867
      %v1887 = vtanh.pop %v1870
      %v1888 = vld [vmem:[%s15] sm:$0xff]
      %v1889 = vld [vmem:[%s15 + $0x8] sm:$0xff]
      %v1890 = vld [vmem:[%s15 + $0x10] sm:$0xff]
      %v1891 = vld [vmem:[%s15 + $0x18] sm:$0xff]
      %v1892 = vld [vmem:[%s15 + $0x20] sm:$0xff]
      %v1893 = vld [vmem:[%s15 + $0x28] sm:$0xff]
      %v1894 = vld [vmem:[%s15 + $0x30] sm:$0xff]
      %v1895 = vld [vmem:[%s15 + $0x38] sm:$0xf]
      %v1896 = vld [vmem:[%s16] sm:$0x1]
      %v1898 = vperm.slane %v1896, 0
      %v1901 = vsel %vm757, %v1872, 0
      %v1904 = vsel %vm757, %v1873, 0
      %v1907 = vsel %vm757, %v1874, 0
      %v1910 = vsel %vm757, %v1875, 0
      %v1913 = vsel %vm757, %v1876, 0
      %v1916 = vsel %vm757, %v1877, 0
      %v1919 = vsel %vm757, %v1878, 0
      %v1922 = vsel %vm757, %v1879, 0
      %v1925 = vsel %vm757, %v1880, 0
      %v1928 = vsel %vm757, %v1881, 0
      %v1931 = vsel %vm757, %v1882, 0
      %v1934 = vsel %vm757, %v1883, 0
      %v1937 = vsel %vm757, %v1884, 0
      %v1940 = vsel %vm757, %v1885, 0
      %v1943 = vsel %vm757, %v1886, 0
      %v1946 = vsel %vm757, %v1887, 0
      %v1949 = vsel %vm806, %v1895, 0
      %1951 = vmatpush.msra.mxu0 0.0
      %1952 = vmatpush.msra.mxu0 0.0
      %1953 = vmatpush.msra.mxu0 0.0
      %1954 = vmatpush.msra.mxu0 0.0
      %1955 = vmatpush.msra.mxu0 0.0
      %1956 = vmatpush.msra.mxu0 0.0
      %1957 = vmatpush.msra.mxu0 0.0
      %1958 = vmatpush.msra.mxu0 0.0
      %1959 = vmatpush.msra.mxu0 %v1949
      %1960 = vmatpush.msra.mxu0 %v1894
      %1961 = vmatpush.msra.mxu0 %v1893
      %1962 = vmatpush.msra.mxu0 %v1892
      %1963 = vmatpush.msra.mxu0 %v1891
      %1964 = vmatpush.msra.mxu0 %v1890
      %1965 = vmatpush.msra.mxu0 %v1889
      %1966 = vmatpush.msra.mxu0 %v1888
      %1967 = vmatmul.f32.gmra.mxu0 %v1901
      %v1968 = vpop.f32.mrf.mxu0
      %v1969 = vadd.f32 %v1898, %v1968
      %1970 = vmatmul.f32.gmra.mxu0 %v1904
      %v1971 = vpop.f32.mrf.mxu0
      %v1972 = vadd.f32 %v1898, %v1971
      %1973 = vmatmul.f32.gmra.mxu0 %v1907
      %v1974 = vpop.f32.mrf.mxu0
      %v1975 = vadd.f32 %v1898, %v1974
      %1976 = vmatmul.f32.gmra.mxu0 %v1910
      %v1977 = vpop.f32.mrf.mxu0
      %v1978 = vadd.f32 %v1898, %v1977
      %1979 = vmatmul.f32.gmra.mxu0 %v1913
      %v1980 = vpop.f32.mrf.mxu0
      %v1981 = vadd.f32 %v1898, %v1980
      %1982 = vmatmul.f32.gmra.mxu0 %v1916
      %v1983 = vpop.f32.mrf.mxu0
      %v1984 = vadd.f32 %v1898, %v1983
      %1985 = vmatmul.f32.gmra.mxu0 %v1919
      %v1986 = vpop.f32.mrf.mxu0
      %v1987 = vadd.f32 %v1898, %v1986
      %1988 = vmatmul.f32.gmra.mxu0 %v1922
      %v1989 = vpop.f32.mrf.mxu0
      %v1990 = vadd.f32 %v1898, %v1989
      %1991 = vmatmul.f32.gmra.mxu0 %v1925
      %v1992 = vpop.f32.mrf.mxu0
      %v1993 = vadd.f32 %v1898, %v1992
      %1994 = vmatmul.f32.gmra.mxu0 %v1928
      %v1995 = vpop.f32.mrf.mxu0
      %v1996 = vadd.f32 %v1898, %v1995
      %1997 = vmatmul.f32.gmra.mxu0 %v1931
      %v1998 = vpop.f32.mrf.mxu0
      %v1999 = vadd.f32 %v1898, %v1998
      %2000 = vmatmul.f32.gmra.mxu0 %v1934
      %v2001 = vpop.f32.mrf.mxu0
      %v2002 = vadd.f32 %v1898, %v2001
      %2003 = vmatmul.f32.gmra.mxu0 %v1937
      %v2004 = vpop.f32.mrf.mxu0
      %v2005 = vadd.f32 %v1898, %v2004
      %2006 = vmatmul.f32.gmra.mxu0 %v1940
      %v2007 = vpop.f32.mrf.mxu0
      %v2008 = vadd.f32 %v1898, %v2007
      %2009 = vmatmul.f32.gmra.mxu0 %v1943
      %v2010 = vpop.f32.mrf.mxu0
      %v2011 = vadd.f32 %v1898, %v2010
      %2012 = vmatmul.f32.gmra.mxu0 %v1946
      %v2013 = vpop.f32.mrf.mxu0
      %v2014 = vadd.f32 %v1898, %v2013
      %2015 = vdwg.mxu0
      %2016 = vst [vmem:[%s585] sm:$0xff] %v1969
      %2017 = vst [vmem:[%s585 + $0x8] sm:$0xff] %v1972
      %2018 = vst [vmem:[%s585 + $0x10] sm:$0xff] %v1975
      %2019 = vst [vmem:[%s585 + $0x18] sm:$0xff] %v1978
      %2020 = vst [vmem:[%s585 + $0x20] sm:$0xff] %v1981
      %2021 = vst [vmem:[%s585 + $0x28] sm:$0xff] %v1984
      %2022 = vst [vmem:[%s585 + $0x30] sm:$0xff] %v1987
      %2023 = vst [vmem:[%s585 + $0x38] sm:$0xff] %v1990
      %2024 = vst [vmem:[%s585 + $0x40] sm:$0xff] %v1993
      %2025 = vst [vmem:[%s585 + $0x48] sm:$0xff] %v1996
      %2026 = vst [vmem:[%s585 + $0x50] sm:$0xff] %v1999
      %2027 = vst [vmem:[%s585 + $0x58] sm:$0xff] %v2002
      %2028 = vst [vmem:[%s585 + $0x60] sm:$0xff] %v2005
      %2029 = vst [vmem:[%s585 + $0x68] sm:$0xff] %v2008
      %2030 = vst [vmem:[%s585 + $0x70] sm:$0xff] %v2011
      %2031 = vst [vmem:[%s585 + $0x78] sm:$0xff] %v2014
      %2032 = vst [vmem:[%s591] sm:$0xff] %v1493
      %2033 = vst [vmem:[%s591 + $0x8] sm:$0xff] %v1494
      %2034 = vst [vmem:[%s591 + $0x10] sm:$0xff] %v1495
      %2035 = vst [vmem:[%s591 + $0x18] sm:$0xff] %v1496
      %2036 = vst [vmem:[%s591 + $0x20] sm:$0xff] %v1497
      %2037 = vst [vmem:[%s591 + $0x28] sm:$0xff] %v1498
      %2038 = vst [vmem:[%s591 + $0x30] sm:$0xff] %v1499
      %2039 = vst [vmem:[%s591 + $0x38] sm:$0xff] %v1500
      %2040 = vst [vmem:[%s591 + $0x40] sm:$0xff] %v1501
      %2041 = vst [vmem:[%s591 + $0x48] sm:$0xff] %v1502
      %2042 = vst [vmem:[%s591 + $0x50] sm:$0xff] %v1503
      %2043 = vst [vmem:[%s591 + $0x58] sm:$0xff] %v1504
      %2044 = vst [vmem:[%s591 + $0x60] sm:$0xff] %v1505
      %2045 = vst [vmem:[%s591 + $0x68] sm:$0xff] %v1506
      %2046 = vst [vmem:[%s591 + $0x70] sm:$0xff] %v1507
      %2047 = vst [vmem:[%s591 + $0x78] sm:$0xff] %v1508
      %s2048 = smul.u32 16, %s30
      %p2049 = scmp.lt.s32.totalorder %s2048, 31
      %s2050 = scalar_select %p2049, %s2048, 31
      %s2051 = smul.addr %s2050, 8
      %s2052 = scalar_lea.vmem %s17, %s2051
      %s2053 = smul.u32 16, %s30
      %p2054 = scmp.lt.s32.totalorder %s2053, 31
      %s2055 = scalar_select %p2054, %s2053, 31
      %s2056 = smul.addr %s2055, 8
      %s2057 = scalar_lea.vmem %s18, %s2056
      // Predicated region
      $region89: #{memae_forward.1} parent=87 // pred_check
        %p2058 = pneg %p410
      $region90: #{memae_forward.1} parent=87 // pred_check_branch
        %2060 = sbr.rel (%p2058) target = $region92
      $region91: #{memae_forward.1} parent=87 // pred_region
        %s2061 = smul.u32 16, %s30
      $region92: #{memae_forward.1} parent=87 // pred_fallthru
        _
      // Predicated region
      $region93: #{memae_forward.1} parent=87 // pred_check
        %p2062 = pneg %p436
      $region94: #{memae_forward.1} parent=87 // pred_check_branch
        %2064 = sbr.rel (%p2062) target = $region96
      $region95: #{memae_forward.1} parent=87 // pred_region
        %s2065 = smul.u32 16, %s30
      $region96: #{memae_forward.1} parent=87 // pred_fallthru
        _
    $region88: #{memae_forward.1} parent=5 // pred_fallthru
      _
    %p2066 = scmp.le.s32.totalorder 2, %s25
    // Predicated region
    $region97: #{memae_forward.1} parent=5 // pred_check
      %p2067 = pneg %p2066
    $region98: #{memae_forward.1} parent=5 // pred_check_branch
      %2069 = sbr.rel (%p2067) target = $region100
    $region99: #{memae_forward.1} parent=5 // pred_region
      %s2070 = ssub.s32 %s25, 2
      // Predicated region
      $region101: #{memae_forward.1} parent=99 // pred_check
        %p2071 = pneg %p416
      $region102: #{memae_forward.1} parent=99 // pred_check_branch
        %2073 = sbr.rel (%p2071) target = $region104
      $region103: #{memae_forward.1} parent=99 // pred_region
        %s2074 = smul.u32 16, %s31
        %p2075 = scmp.lt.s32.totalorder %s2074, 31
        %s2076 = scalar_select %p2075, %s2074, 31
        %s2077 = smul.addr %s2076, 8
        %s2078 = scalar_lea.vmem %s17, %s2077
      $region104: #{memae_forward.1} parent=99 // pred_fallthru
        _
      // Predicated region
      $region105: #{memae_forward.1} parent=99 // pred_check
        %p2079 = pneg %p442
      $region106: #{memae_forward.1} parent=99 // pred_check_branch
        %2081 = sbr.rel (%p2079) target = $region108
      $region107: #{memae_forward.1} parent=99 // pred_region
        %s2082 = smul.u32 16, %s31
        %p2083 = scmp.lt.s32.totalorder %s2082, 31
        %s2084 = scalar_select %p2083, %s2082, 31
        %s2085 = smul.addr %s2084, 8
        %s2086 = scalar_lea.vmem %s18, %s2085
      $region108: #{memae_forward.1} parent=99 // pred_fallthru
        _
    $region100: #{memae_forward.1} parent=5 // pred_fallthru
      _
  $region6: #{memae_forward.1} parent=0 // loop_footer
    %s29 = sadd.s32 1, %s25
  $region7: #{memae_forward.1} parent=0 // loop_footer_branch
    %24 = sbr.rel target = $region3
  $region8: #{memae_forward.1} parent=0 // loop_exit
    _

</llo_original>
